<compile_context>
chip_gen: v7x
topology: tpu7x:2x2x1
jax: 0.10.0
libtpu: 0.0.40
codegen_flags: <defaults>
</compile_context>

<pallas_src>
import functools

import jax
import jax.numpy as jnp
from jax import lax
from jax.experimental import pallas as pl
from jax.experimental.pallas import tpu as pltpu


# --------------------------------- kernel ---------------------------------
def basic_block_kernel(x_ref,
                       b1_top_ref, b1_mid_ref, b1_bot_ref, bias1_ref,
                       b2_top_ref, b2_mid_ref, b2_bot_ref, bias2_ref,
                       out_ref, *, proj):
    """conv3x3+bn1+relu -> conv3x3+bn2 -> (+shortcut) -> relu, lane-dense rows."""
    nb, H, WCin = x_ref.shape
    WCout = out_ref.shape[-1]
    M = nb * H

    x_f32 = x_ref[...]                               # (nb, H, W*Cin) f32
    x_bf = x_f32.astype(jnp.bfloat16)
    zrow = jnp.zeros((nb, 1, WCin), jnp.bfloat16)
    # kh=0 tap reads row h-1, kh=2 tap reads row h+1 (zero rows = H zero-padding).
    x_up = jnp.concatenate([zrow, x_bf[:, :H - 1, :]], axis=1)
    x_dn = jnp.concatenate([x_bf[:, 1:, :], zrow], axis=1)

    # ---- conv1 (+ fused 1x1 projection shortcut in the center-row matmul) ----
    d_top = jnp.dot(x_up.reshape(M, WCin), b1_top_ref[...],
                    preferred_element_type=jnp.float32)
    d_mid = jnp.dot(x_bf.reshape(M, WCin), b1_mid_ref[...],
                    preferred_element_type=jnp.float32)
    d_bot = jnp.dot(x_dn.reshape(M, WCin), b1_bot_ref[...],
                    preferred_element_type=jnp.float32)

    if proj:
        out1 = d_top + d_mid[:, :WCout] + d_bot
        sc = d_mid[:, WCout:]                        # shortcut (BN scale folded into weights)
    else:
        out1 = d_top + d_mid + d_bot
        sc = x_f32.reshape(M, WCin)                  # exact f32 identity residual

    out1 = jnp.maximum(out1 + bias1_ref[...], 0.0)   # bn1 bias + relu (f32)

    # ---- conv2 ----------------------------------------------------------------
    p1 = out1.astype(jnp.bfloat16).reshape(nb, H, WCout)
    zrow2 = jnp.zeros((nb, 1, WCout), jnp.bfloat16)
    p_up = jnp.concatenate([zrow2, p1[:, :H - 1, :]], axis=1)
    p_dn = jnp.concatenate([p1[:, 1:, :], zrow2], axis=1)

    e_top = jnp.dot(p_up.reshape(M, WCout), b2_top_ref[...],
                    preferred_element_type=jnp.float32)
    e_mid = jnp.dot(p1.reshape(M, WCout), b2_mid_ref[...],
                    preferred_element_type=jnp.float32)
    e_bot = jnp.dot(p_dn.reshape(M, WCout), b2_bot_ref[...],
                    preferred_element_type=jnp.float32)

    out = jnp.maximum(e_top + e_mid + e_bot + sc + bias2_ref[...], 0.0)
    out_ref[...] = out.reshape(nb, H, WCout)         # lane-dense (128-lane) store


# --------------------------------- wrapper ---------------------------------
def _fold_bn(gamma, beta, mean, var, eps=1e-5):
    scale = gamma / jnp.sqrt(var + eps)
    return scale.astype(jnp.float32), (beta - mean * scale).astype(jnp.float32)


def _band_matrices(w_oihw, W, col_scale):
    """3x3 conv (OIHW) -> 3 block-banded matrices (W*Cin, W*Cout), one per kh.

    B_kh[(w+kw-1)*Cin + ci, w*Cout + co] = w[co, ci, kh, kw] * col_scale[co];
    out-of-range (w+kw-1) entries are absent -> implicit zero padding in W.
    """
    wk = jnp.transpose(w_oihw, (2, 3, 1, 0)).astype(jnp.float32)   # (3,3,Cin,Cout)
    colscale = jnp.tile(col_scale, W)[None, :]
    mats = []
    for kh in range(3):
        B = sum(jnp.kron(jnp.eye(W, k=1 - kw, dtype=jnp.float32), wk[kh, kw])
                for kw in range(3))
        mats.append((B * colscale).astype(jnp.bfloat16))
    return mats


def basic_block(x_nchw, p, *, batch_tile=4):
    """x_nchw: (N, Cin, H, W) f32 -> (N, Cout, H, W). stride=1 BasicBlock, eval-mode BN."""
    N, Cin, H, W = x_nchw.shape
    Cout = p['w1'].shape[0]
    nb = batch_tile
    assert N % nb == 0, (N, nb)

    # NCHW -> lane-dense rows (N, H, W*Cin). No HBM-side spatial padding.
    x = jnp.transpose(x_nchw, (0, 2, 3, 1)).reshape(N, H, W * Cin).astype(jnp.float32)

    s1, bi1 = _fold_bn(p['g1'], p['b1'], p['m1'], p['v1'])
    s2, bi2 = _fold_bn(p['g2'], p['b2'], p['m2'], p['v2'])
    b1_top, b1_mid, b1_bot = _band_matrices(p['w1'], W, s1)        # (W*Cin, W*Cout)
    b2_top, b2_mid, b2_bot = _band_matrices(p['w2'], W, s2)        # (W*Cout, W*Cout)

    proj = 'ws' in p
    if proj:
        ss, bis = _fold_bn(p['gs'], p['bs'], p['ms'], p['vs'])
        ws_ic = p['ws'][:, :, 0, 0].T.astype(jnp.float32)          # (Cin, Cout)
        bshort = (jnp.kron(jnp.eye(W, dtype=jnp.float32), ws_ic)
                  * jnp.tile(ss, W)[None, :]).astype(jnp.bfloat16)
        b1_mid = jnp.concatenate([b1_mid, bshort], axis=1)         # (W*Cin, 2*W*Cout)
        bias2 = jnp.tile(bi2 + bis, W)[None, :]
    else:
        assert Cin == Cout, "identity shortcut requires Cin == Cout"
        bias2 = jnp.tile(bi2, W)[None, :]
    bias1 = jnp.tile(bi1, W)[None, :]

    WCin, WCout = W * Cin, W * Cout

    def full(shape):
        return pl.BlockSpec(shape, lambda i: (0, 0))

    out_flat = pl.pallas_call(
        functools.partial(basic_block_kernel, proj=proj),
        out_shape=jax.ShapeDtypeStruct((N, H, WCout), jnp.float32),
        grid_spec=pltpu.PrefetchScalarGridSpec(
            num_scalar_prefetch=0,
            grid=(N // nb,),
            in_specs=[
                pl.BlockSpec((nb, H, WCin), lambda i: (i, 0, 0)),
                full(b1_top.shape), full(b1_mid.shape), full(b1_bot.shape),
                full(bias1.shape),
                full(b2_top.shape), full(b2_mid.shape), full(b2_bot.shape),
                full(bias2.shape),
            ],
            out_specs=pl.BlockSpec((nb, H, WCout), lambda i: (i, 0, 0)),
        ),
        compiler_params=pltpu.CompilerParams(
            dimension_semantics=("parallel",),        # batch tiles -> megacore on v7x
            vmem_limit_bytes=32 * 1024 * 1024,
        ),
    )(x, b1_top, b1_mid, b1_bot, bias1, b2_top, b2_mid, b2_bot, bias2)

    out = out_flat.reshape(N, H, W, Cout)
    return jnp.transpose(out, (0, 3, 1, 2))


# ------------------------- pure-JAX reference (NCHW, like PyTorch) -------------------------
def _bn_eval_nchw(x, gamma, beta, mean, var, eps=1e-5):
    s = (gamma / jnp.sqrt(var + eps)).reshape(1, -1, 1, 1)
    b = (beta - mean * gamma / jnp.sqrt(var + eps)).reshape(1, -1, 1, 1)
    return x * s + b


def ref_forward(x, p):
    dn = ('NCHW', 'OIHW', 'NCHW')
    out = lax.conv_general_dilated(x, p['w1'], (1, 1), ((1, 1), (1, 1)), dimension_numbers=dn)
    out = jnp.maximum(_bn_eval_nchw(out, p['g1'], p['b1'], p['m1'], p['v1']), 0.0)
    out = lax.conv_general_dilated(out, p['w2'], (1, 1), ((1, 1), (1, 1)), dimension_numbers=dn)
    out = _bn_eval_nchw(out, p['g2'], p['b2'], p['m2'], p['v2'])
    if 'ws' in p:
        sc = lax.conv_general_dilated(x, p['ws'], (1, 1), ((0, 0), (0, 0)), dimension_numbers=dn)
        sc = _bn_eval_nchw(sc, p['gs'], p['bs'], p['ms'], p['vs'])
    else:
        sc = x
    return jnp.maximum(out + sc, 0.0)


def _make_params(key, Cin, Cout, proj):
    ks = jax.random.split(key, 16)
    params = {
        'w1': 0.1 * jax.random.normal(ks[0], (Cout, Cin, 3, 3), jnp.float32),
        'w2': 0.1 * jax.random.normal(ks[1], (Cout, Cout, 3, 3), jnp.float32),
        'g1': 1.0 + 0.1 * jax.random.normal(ks[3], (Cout,), jnp.float32),
        'b1': 0.1 * jax.random.normal(ks[4], (Cout,), jnp.float32),
        'm1': 0.1 * jax.random.normal(ks[5], (Cout,), jnp.float32),
        'v1': jax.random.uniform(ks[6], (Cout,), jnp.float32, 0.5, 1.5),
        'g2': 1.0 + 0.1 * jax.random.normal(ks[7], (Cout,), jnp.float32),
        'b2': 0.1 * jax.random.normal(ks[8], (Cout,), jnp.float32),
        'm2': 0.1 * jax.random.normal(ks[9], (Cout,), jnp.float32),
        'v2': jax.random.uniform(ks[10], (Cout,), jnp.float32, 0.5, 1.5),
    }
    if proj:
        params.update({
            'ws': 0.1 * jax.random.normal(ks[2], (Cout, Cin, 1, 1), jnp.float32),
            'gs': 1.0 + 0.1 * jax.random.normal(ks[11], (Cout,), jnp.float32),
            'bs': 0.1 * jax.random.normal(ks[12], (Cout,), jnp.float32),
            'ms': 0.1 * jax.random.normal(ks[13], (Cout,), jnp.float32),
            'vs': jax.random.uniform(ks[14], (Cout,), jnp.float32, 0.5, 1.5),
        })
    return params


if __name__ == "__main__":
    key = jax.random.PRNGKey(0)
    k_proj, k_id, k_x1, k_x2 = jax.random.split(key, 4)

    N, H, W = 8, 16, 16      # small test; for real workloads sweep batch_tile in 8..64

    # ---- projection-shortcut block (Cin != Cout) ----
    Cin, Cout = 4, 8
    params = _make_params(k_proj, Cin, Cout, proj=True)
    x = jax.random.normal(k_x1, (N, Cin, H, W), jnp.float32)
    out = jax.block_until_ready(basic_block(x, params, batch_tile=4))
    ref = jax.block_until_ready(ref_forward(x, params))
    assert out.shape == (N, Cout, H, W), out.shape
    err = float(jnp.max(jnp.abs(out - ref)))
    assert jnp.allclose(out, ref, atol=5e-2, rtol=5e-2), err   # bf16 matmuls vs f32 ref

    # ---- identity-shortcut block (Cin == Cout) ----
    C = 8
    params_id = _make_params(k_id, C, C, proj=False)
    x2 = jax.random.normal(k_x2, (N, C, H, W), jnp.float32)
    out2 = jax.block_until_ready(basic_block(x2, params_id, batch_tile=4))
    ref2 = jax.block_until_ready(ref_forward(x2, params_id))
    assert out2.shape == (N, C, H, W), out2.shape
    err2 = float(jnp.max(jnp.abs(out2 - ref2)))
    assert jnp.allclose(out2, ref2, atol=5e-2, rtol=5e-2), err2

    print("KERNEL_OK")
</pallas_src>

<mosaic_0001>
module attributes {stable_mosaic.version = 11 : i64} {
  func.func @basic_block_kernel(%arg0: i32, %arg1: memref<4x16x64xf32, #tpu.memory_space<vmem>>, %arg2: memref<64x128xbf16, #tpu.memory_space<vmem>>, %arg3: memref<64x256xbf16, #tpu.memory_space<vmem>>, %arg4: memref<64x128xbf16, #tpu.memory_space<vmem>>, %arg5: memref<1x128xf32, #tpu.memory_space<vmem>>, %arg6: memref<128x128xbf16, #tpu.memory_space<vmem>>, %arg7: memref<128x128xbf16, #tpu.memory_space<vmem>>, %arg8: memref<128x128xbf16, #tpu.memory_space<vmem>>, %arg9: memref<1x128xf32, #tpu.memory_space<vmem>>, %arg10: memref<4x16x128xf32, #tpu.memory_space<vmem>>) attributes {dimension_semantics = [#tpu.dimension_semantics<parallel>], iteration_bounds = array<i64: 2>, scalar_prefetch = 0 : i64, scratch_operands = 0 : i64, tpu.core_type = #tpu.core_type<tc>, window_params = [{transform_indices = @transform_0, window_bounds = array<i64: 4, 16, 64>}, {pipeline_mode = #tpu.pipeline_mode<synchronous>, transform_indices = @transform_1, window_bounds = array<i64: 64, 128>}, {pipeline_mode = #tpu.pipeline_mode<synchronous>, transform_indices = @transform_2, window_bounds = array<i64: 64, 256>}, {pipeline_mode = #tpu.pipeline_mode<synchronous>, transform_indices = @transform_3, window_bounds = array<i64: 64, 128>}, {pipeline_mode = #tpu.pipeline_mode<synchronous>, transform_indices = @transform_4, window_bounds = array<i64: 1, 128>}, {pipeline_mode = #tpu.pipeline_mode<synchronous>, transform_indices = @transform_5, window_bounds = array<i64: 128, 128>}, {pipeline_mode = #tpu.pipeline_mode<synchronous>, transform_indices = @transform_6, window_bounds = array<i64: 128, 128>}, {pipeline_mode = #tpu.pipeline_mode<synchronous>, transform_indices = @transform_7, window_bounds = array<i64: 128, 128>}, {pipeline_mode = #tpu.pipeline_mode<synchronous>, transform_indices = @transform_8, window_bounds = array<i64: 1, 128>}, {transform_indices = @transform_9, window_bounds = array<i64: 4, 16, 128>}]} {
    %c0 = arith.constant 0 : index
    %c0_0 = arith.constant 0 : index
    %c0_1 = arith.constant 0 : index
    %0 = vector.load %arg1[%c0, %c0_0, %c0_1] : memref<4x16x64xf32, #tpu.memory_space<vmem>>, vector<4x16x64xf32>
    %1 = arith.truncf %0 : vector<4x16x64xf32> to vector<4x16x64xbf16>
    %cst = arith.constant 0.000000e+00 : bf16
    %2 = vector.broadcast %cst : bf16 to vector<4x1x64xbf16>
    %3 = vector.extract_strided_slice %1 {offsets = [0, 0, 0], sizes = [4, 15, 64], strides = [1, 1, 1]} : vector<4x16x64xbf16> to vector<4x15x64xbf16>
    %4 = tpu.concatenate %2, %3 in 1 : vector<4x1x64xbf16>, vector<4x15x64xbf16> -> vector<4x16x64xbf16>
    %5 = vector.extract_strided_slice %1 {offsets = [0, 1, 0], sizes = [4, 15, 64], strides = [1, 1, 1]} : vector<4x16x64xbf16> to vector<4x15x64xbf16>
    %6 = tpu.concatenate %5, %2 in 1 : vector<4x15x64xbf16>, vector<4x1x64xbf16> -> vector<4x16x64xbf16>
    %7 = vector.shape_cast %4 : vector<4x16x64xbf16> to vector<64x64xbf16>
    %c0_2 = arith.constant 0 : index
    %c0_3 = arith.constant 0 : index
    %8 = vector.load %arg2[%c0_2, %c0_3] : memref<64x128xbf16, #tpu.memory_space<vmem>>, vector<64x128xbf16>
    %cst_4 = arith.constant dense<0.000000e+00> : vector<64x128xf32>
    %9 = tpu.matmul %7, %8, %cst_4 {dimension_numbers = #tpu.dot_dimension_numbers<[1], [0], [0], [1], [0, 0, 1, 1], [], []>} : vector<64x64xbf16>, vector<64x128xbf16>, vector<64x128xf32> -> vector<64x128xf32>
    %10 = vector.shape_cast %1 : vector<4x16x64xbf16> to vector<64x64xbf16>
    %c0_5 = arith.constant 0 : index
    %c0_6 = arith.constant 0 : index
    %11 = vector.load %arg3[%c0_5, %c0_6] : memref<64x256xbf16, #tpu.memory_space<vmem>>, vector<64x256xbf16>
    %cst_7 = arith.constant dense<0.000000e+00> : vector<64x256xf32>
    %12 = tpu.matmul %10, %11, %cst_7 {dimension_numbers = #tpu.dot_dimension_numbers<[1], [0], [0], [1], [0, 0, 1, 1], [], []>} : vector<64x64xbf16>, vector<64x256xbf16>, vector<64x256xf32> -> vector<64x256xf32>
    %13 = vector.shape_cast %6 : vector<4x16x64xbf16> to vector<64x64xbf16>
    %c0_8 = arith.constant 0 : index
    %c0_9 = arith.constant 0 : index
    %14 = vector.load %arg4[%c0_8, %c0_9] : memref<64x128xbf16, #tpu.memory_space<vmem>>, vector<64x128xbf16>
    %cst_10 = arith.constant dense<0.000000e+00> : vector<64x128xf32>
    %15 = tpu.matmul %13, %14, %cst_10 {dimension_numbers = #tpu.dot_dimension_numbers<[1], [0], [0], [1], [0, 0, 1, 1], [], []>} : vector<64x64xbf16>, vector<64x128xbf16>, vector<64x128xf32> -> vector<64x128xf32>
    %16 = vector.extract_strided_slice %12 {offsets = [0, 0], sizes = [64, 128], strides = [1, 1]} : vector<64x256xf32> to vector<64x128xf32>
    %17 = arith.addf %9, %16 : vector<64x128xf32>
    %18 = arith.addf %17, %15 : vector<64x128xf32>
    %19 = vector.extract_strided_slice %12 {offsets = [0, 128], sizes = [64, 128], strides = [1, 1]} : vector<64x256xf32> to vector<64x128xf32>
    %c0_11 = arith.constant 0 : index
    %c0_12 = arith.constant 0 : index
    %20 = vector.load %arg5[%c0_11, %c0_12] : memref<1x128xf32, #tpu.memory_space<vmem>>, vector<1x128xf32>
    %21 = vector.broadcast %20 : vector<1x128xf32> to vector<64x128xf32>
    %22 = arith.addf %18, %21 : vector<64x128xf32>
    %cst_13 = arith.constant 0.000000e+00 : f32
    %23 = vector.broadcast %cst_13 : f32 to vector<64x128xf32>
    %24 = arith.maximumf %22, %23 : vector<64x128xf32>
    %25 = arith.truncf %24 : vector<64x128xf32> to vector<64x128xbf16>
    %26 = vector.shape_cast %25 : vector<64x128xbf16> to vector<4x16x128xbf16>
    %cst_14 = arith.constant 0.000000e+00 : bf16
    %27 = vector.broadcast %cst_14 : bf16 to vector<4x1x128xbf16>
    %28 = vector.extract_strided_slice %26 {offsets = [0, 0, 0], sizes = [4, 15, 128], strides = [1, 1, 1]} : vector<4x16x128xbf16> to vector<4x15x128xbf16>
    %29 = tpu.concatenate %27, %28 in 1 : vector<4x1x128xbf16>, vector<4x15x128xbf16> -> vector<4x16x128xbf16>
    %30 = vector.extract_strided_slice %26 {offsets = [0, 1, 0], sizes = [4, 15, 128], strides = [1, 1, 1]} : vector<4x16x128xbf16> to vector<4x15x128xbf16>
    %31 = tpu.concatenate %30, %27 in 1 : vector<4x15x128xbf16>, vector<4x1x128xbf16> -> vector<4x16x128xbf16>
    %32 = vector.shape_cast %29 : vector<4x16x128xbf16> to vector<64x128xbf16>
    %c0_15 = arith.constant 0 : index
    %c0_16 = arith.constant 0 : index
    %33 = vector.load %arg6[%c0_15, %c0_16] : memref<128x128xbf16, #tpu.memory_space<vmem>>, vector<128x128xbf16>
    %cst_17 = arith.constant dense<0.000000e+00> : vector<64x128xf32>
    %34 = tpu.matmul %32, %33, %cst_17 {dimension_numbers = #tpu.dot_dimension_numbers<[1], [0], [0], [1], [0, 0, 1, 1], [], []>} : vector<64x128xbf16>, vector<128x128xbf16>, vector<64x128xf32> -> vector<64x128xf32>
    %35 = vector.shape_cast %26 : vector<4x16x128xbf16> to vector<64x128xbf16>
    %c0_18 = arith.constant 0 : index
    %c0_19 = arith.constant 0 : index
    %36 = vector.load %arg7[%c0_18, %c0_19] : memref<128x128xbf16, #tpu.memory_space<vmem>>, vector<128x128xbf16>
    %cst_20 = arith.constant dense<0.000000e+00> : vector<64x128xf32>
    %37 = tpu.matmul %35, %36, %cst_20 {dimension_numbers = #tpu.dot_dimension_numbers<[1], [0], [0], [1], [0, 0, 1, 1], [], []>} : vector<64x128xbf16>, vector<128x128xbf16>, vector<64x128xf32> -> vector<64x128xf32>
    %38 = vector.shape_cast %31 : vector<4x16x128xbf16> to vector<64x128xbf16>
    %c0_21 = arith.constant 0 : index
    %c0_22 = arith.constant 0 : index
    %39 = vector.load %arg8[%c0_21, %c0_22] : memref<128x128xbf16, #tpu.memory_space<vmem>>, vector<128x128xbf16>
    %cst_23 = arith.constant dense<0.000000e+00> : vector<64x128xf32>
    %40 = tpu.matmul %38, %39, %cst_23 {dimension_numbers = #tpu.dot_dimension_numbers<[1], [0], [0], [1], [0, 0, 1, 1], [], []>} : vector<64x128xbf16>, vector<128x128xbf16>, vector<64x128xf32> -> vector<64x128xf32>
    %41 = arith.addf %34, %37 : vector<64x128xf32>
    %42 = arith.addf %41, %40 : vector<64x128xf32>
    %43 = arith.addf %42, %19 : vector<64x128xf32>
    %c0_24 = arith.constant 0 : index
    %c0_25 = arith.constant 0 : index
    %44 = vector.load %arg9[%c0_24, %c0_25] : memref<1x128xf32, #tpu.memory_space<vmem>>, vector<1x128xf32>
    %45 = vector.broadcast %44 : vector<1x128xf32> to vector<64x128xf32>
    %46 = arith.addf %43, %45 : vector<64x128xf32>
    %cst_26 = arith.constant 0.000000e+00 : f32
    %47 = vector.broadcast %cst_26 : f32 to vector<64x128xf32>
    %48 = arith.maximumf %46, %47 : vector<64x128xf32>
    %49 = vector.shape_cast %48 : vector<64x128xf32> to vector<4x16x128xf32>
    %c0_27 = arith.constant 0 : index
    %c0_28 = arith.constant 0 : index
    %c0_29 = arith.constant 0 : index
    %50 = vector.load %arg10[%c0_27, %c0_28, %c0_29] : memref<4x16x128xf32, #tpu.memory_space<vmem>>, vector<4x16x128xf32>
    tpu.vector_store %arg10[%c0_27, %c0_28, %c0_29], %49 {strides = array<i32>} : memref<4x16x128xf32, #tpu.memory_space<vmem>>, vector<4x16x128xf32>,
    return
  }
  func.func @transform_0(%arg0: i32) -> (i32, i32, i32) {
    %c0_i32 = arith.constant 0 : i32
    %c0_i32_0 = arith.constant 0 : i32
    %c0_i32_1 = arith.constant 0 : i32
    return %arg0, %c0_i32, %c0_i32_0 : i32, i32, i32
  }
  func.func @transform_1(%arg0: i32) -> (i32, i32) {
    %c0_i32 = arith.constant 0 : i32
    %c0_i32_0 = arith.constant 0 : i32
    %c0_i32_1 = arith.constant 0 : i32
    return %c0_i32, %c0_i32_0 : i32, i32
  }
  func.func @transform_2(%arg0: i32) -> (i32, i32) {
    %c0_i32 = arith.constant 0 : i32
    %c0_i32_0 = arith.constant 0 : i32
    %c0_i32_1 = arith.constant 0 : i32
    return %c0_i32, %c0_i32_0 : i32, i32
  }
  func.func @transform_3(%arg0: i32) -> (i32, i32) {
    %c0_i32 = arith.constant 0 : i32
    %c0_i32_0 = arith.constant 0 : i32
    %c0_i32_1 = arith.constant 0 : i32
    return %c0_i32, %c0_i32_0 : i32, i32
  }
  func.func @transform_4(%arg0: i32) -> (i32, i32) {
    %c0_i32 = arith.constant 0 : i32
    %c0_i32_0 = arith.constant 0 : i32
    %c0_i32_1 = arith.constant 0 : i32
    return %c0_i32, %c0_i32_0 : i32, i32
  }
  func.func @transform_5(%arg0: i32) -> (i32, i32) {
    %c0_i32 = arith.constant 0 : i32
    %c0_i32_0 = arith.constant 0 : i32
    %c0_i32_1 = arith.constant 0 : i32
    return %c0_i32, %c0_i32_0 : i32, i32
  }
  func.func @transform_6(%arg0: i32) -> (i32, i32) {
    %c0_i32 = arith.constant 0 : i32
    %c0_i32_0 = arith.constant 0 : i32
    %c0_i32_1 = arith.constant 0 : i32
    return %c0_i32, %c0_i32_0 : i32, i32
  }
  func.func @transform_7(%arg0: i32) -> (i32, i32) {
    %c0_i32 = arith.constant 0 : i32
    %c0_i32_0 = arith.constant 0 : i32
    %c0_i32_1 = arith.constant 0 : i32
    return %c0_i32, %c0_i32_0 : i32, i32
  }
  func.func @transform_8(%arg0: i32) -> (i32, i32) {
    %c0_i32 = arith.constant 0 : i32
    %c0_i32_0 = arith.constant 0 : i32
    %c0_i32_1 = arith.constant 0 : i32
    return %c0_i32, %c0_i32_0 : i32, i32
  }
  func.func @transform_9(%arg0: i32) -> (i32, i32, i32) {
    %c0_i32 = arith.constant 0 : i32
    %c0_i32_0 = arith.constant 0 : i32
    %c0_i32_1 = arith.constant 0 : i32
    return %arg0, %c0_i32, %c0_i32_0 : i32, i32, i32
  }
}

</mosaic_0001>

<llo_original>
// kernel: tpu_custom_call.1
$region0: #{tpu_custom_call.1}
  #allocation0 [shape = 'u32[]', space=smem, size = 0x4, offset = 0x4, fixed_abs, tag = 'smem constant byte address 0x4 - core index']
  #allocation1 [shape = 'u32[144,128]{1,0:T(1,128)}', space=vmem, size = 0x12000, scoped, tag = 'internal scratch']
  %s0 = inlined_call_operand.hbm [shape: f32[8,16,64], index: 0, kind: input, shape index: {}]
  %s1 = inlined_call_operand.hbm [shape: bf16[64,128], index: 1, kind: input, shape index: {}]
  %s2 = inlined_call_operand.hbm [shape: bf16[64,256], index: 2, kind: input, shape index: {}]
  %s3 = inlined_call_operand.hbm [shape: bf16[64,128], index: 3, kind: input, shape index: {}]
  %s4 = inlined_call_operand.vmem [shape: f32[1,128], index: 4, kind: input, shape index: {}]
  %s5 = inlined_call_operand.hbm [shape: bf16[128,128], index: 5, kind: input, shape index: {}]
  %s6 = inlined_call_operand.hbm [shape: bf16[128,128], index: 6, kind: input, shape index: {}]
  %s7 = inlined_call_operand.hbm [shape: bf16[128,128], index: 7, kind: input, shape index: {}]
  %s8 = inlined_call_operand.vmem [shape: f32[1,128], index: 8, kind: input, shape index: {}]
  %s9 = inlined_call_operand.hbm [shape: f32[8,16,128], index: 9, kind: output, shape index: {}]
  %s10 = sld [smem:[#allocation0]]
  $region97: #{tpu_custom_call.1} parent=0
    _
  %s12 = ssub.s32 1, %s10
  %s13 = scalar_select 0, %s12, %s10
  $region1: #{tpu_custom_call.1} parent=0
    #allocation2 [shape = 'u8[65536]{0}', space=vmem, size = 0x10000, scoped, tag = 'input window, operand 0']
    #allocation3 [shape = 's32[2]{0}', space=sflag, size = 0x8, scoped, tag = 'scoped memory for tpu_custom_call.1']
    #allocation4 [shape = 's32[2]{0}', space=sflag, size = 0x8, scoped, tag = 'scoped memory for tpu_custom_call.1']
    #allocation5 [shape = 'u8[16384]{0}', space=vmem, size = 0x4000, scoped, tag = 'input window, operand 1, single buffered']
    #allocation6 [shape = 's32[1]{0}', space=sflag, size = 0x4, scoped, tag = 'scoped memory for tpu_custom_call.1']
    #allocation7 [shape = 'u8[32768]{0}', space=vmem, size = 0x8000, scoped, tag = 'input window, operand 2, single buffered']
    #allocation8 [shape = 'u8[16384]{0}', space=vmem, size = 0x4000, scoped, tag = 'input window, operand 3, single buffered']
    #allocation9 [shape = 's32[1]{0}', space=sflag, size = 0x4, scoped, tag = 'scoped memory for tpu_custom_call.1']
    #allocation10 [shape = 'u8[32768]{0}', space=vmem, size = 0x8000, scoped, tag = 'input window, operand 5, single buffered']
    #allocation11 [shape = 'u8[32768]{0}', space=vmem, size = 0x8000, scoped, tag = 'input window, operand 6, single buffered']
    #allocation12 [shape = 's32[1]{0}', space=sflag, size = 0x4, scoped, tag = 'scoped memory for tpu_custom_call.1']
    #allocation13 [shape = 'u8[32768]{0}', space=vmem, size = 0x8000, scoped, tag = 'input window, operand 7, single buffered']
    #allocation14 [shape = 'u8[65536]{0}', space=vmem, size = 0x10000, scoped, tag = 'output window, operand 0']
    %14 = vsyncpa [#allocation3], 0
    %s15 = scalar_lea.sflag [#allocation3], 1
    %16 = vsyncpa %s15, 0
    %17 = vsyncpa [#allocation6], 0
    %18 = vsyncpa [#allocation9], 0
    %19 = vsyncpa [#allocation12], 0
    %20 = vsyncpa [#allocation4], 0
    %s21 = scalar_lea.sflag [#allocation4], 1
    %22 = vsyncpa %s21, 0
    loop: start=0, step=1, limit=4
    $region2: #{tpu_custom_call.1} parent=1 // loop_pre_header
      _
    $region3: #{tpu_custom_call.1} parent=1 // loop_header
      %s24 = sphi 0, %s28
      %p25 = scmp.ge.s32.totalorder %s24, 4
      %s34 = sphi 0, %s36
      %s37 = sphi 0, %s34
      %s38 = sphi 0, %s37
      %s54 = sphi 0, %s38
      %s58 = sphi 0, %s58
      %s60 = sphi 0, %s58
      %s61 = sphi 0, %s60
      %s75 = sphi 0, %s61
      %s79 = sphi 0, %s79
      %s81 = sphi 0, %s79
      %s82 = sphi 0, %s81
      %s96 = sphi 0, %s82
      %s100 = sphi 0, %s100
      %s102 = sphi 0, %s100
      %s103 = sphi 0, %s102
      %s117 = sphi 0, %s103
      %s121 = sphi 0, %s121
      %s123 = sphi 0, %s121
      %s124 = sphi 0, %s123
      %s138 = sphi 0, %s124
      %s142 = sphi 0, %s142
      %s144 = sphi 0, %s142
      %s145 = sphi 0, %s144
      %s159 = sphi 0, %s145
      %s163 = sphi 0, %s163
      %s165 = sphi 0, %s163
      %s166 = sphi 0, %s165
      %s180 = sphi 0, %s166
      %s184 = sphi 0, %s184
      %s186 = sphi 0, %s184
      %s187 = sphi 0, %s186
      %s201 = sphi 0, %s187
      %s205 = sphi 0, %s205
      %s207 = sphi 0, %s205
      %s208 = sphi 0, %s207
      %s222 = sphi 0, %s208
      %s228 = sphi 0, %s230
      %s231 = sphi 0, %s228
      %s232 = sphi 0, %s231
      %s248 = sphi 0, %s232
    $region4: #{tpu_custom_call.1} parent=1 // loop_header_branch
      %27 = sbr.rel (%p25) target = $region8
    $region5: #{tpu_custom_call.1} parent=1 // loop_body
      %s29 = ssub.s32 %s24, 1
      %s30 = ssub.s32 %s24, 2
      %s31 = sadd.s32 %s24, 1
      %s32 = ssub.s32 %s24, %s31
      %p33 = scmp.eq.s32.totalorder %s32, 0
      %s35 = sadd.s32 %s34, 1
      %s36 = scalar_select %p33, %s34, %s35
      %p39 = pneg %p33
      %p40 = scmp.eq.s32.totalorder %s24, 1
      %p41 = por %p39, %p40
      %p42 = scmp.ne.s32.totalorder %s34, %s37
      %p43 = scmp.eq.s32.totalorder %s24, 0
      %p44 = por %p42, %p43
      %p45 = scmp.ne.s32.totalorder %s34, %s37
      %p46 = scmp.eq.s32.totalorder %s29, 1
      %p47 = por %p45, %p46
      %p48 = scmp.ne.s32.totalorder %s37, %s38
      %p49 = scmp.eq.s32.totalorder %s29, 0
      %p50 = por %p48, %p49
      %p51 = scmp.ne.s32.totalorder %s37, %s38
      %p52 = scmp.eq.s32.totalorder %s30, 1
      %p53 = por %p51, %p52
      %p55 = scmp.ne.s32.totalorder %s38, %s54
      %p56 = scmp.eq.s32.totalorder %s30, 0
      %p57 = por %p55, %p56
      %s59 = sadd.s32 %s58, 1
      %p62 = scmp.eq.s32.totalorder %s24, 1
      %p63 = scmp.ne.s32.totalorder %s58, %s60
      %p64 = scmp.eq.s32.totalorder %s24, 0
      %p65 = por %p63, %p64
      %p66 = scmp.ne.s32.totalorder %s58, %s60
      %p67 = scmp.eq.s32.totalorder %s29, 1
      %p68 = por %p66, %p67
      %p69 = scmp.ne.s32.totalorder %s60, %s61
      %p70 = scmp.eq.s32.totalorder %s29, 0
      %p71 = por %p69, %p70
      %p72 = scmp.ne.s32.totalorder %s60, %s61
      %p73 = scmp.eq.s32.totalorder %s30, 1
      %p74 = por %p72, %p73
      %p76 = scmp.ne.s32.totalorder %s61, %s75
      %p77 = scmp.eq.s32.totalorder %s30, 0
      %p78 = por %p76, %p77
      %s80 = sadd.s32 %s79, 1
      %p83 = scmp.eq.s32.totalorder %s24, 1
      %p84 = scmp.ne.s32.totalorder %s79, %s81
      %p85 = scmp.eq.s32.totalorder %s24, 0
      %p86 = por %p84, %p85
      %p87 = scmp.ne.s32.totalorder %s79, %s81
      %p88 = scmp.eq.s32.totalorder %s29, 1
      %p89 = por %p87, %p88
      %p90 = scmp.ne.s32.totalorder %s81, %s82
      %p91 = scmp.eq.s32.totalorder %s29, 0
      %p92 = por %p90, %p91
      %p93 = scmp.ne.s32.totalorder %s81, %s82
      %p94 = scmp.eq.s32.totalorder %s30, 1
      %p95 = por %p93, %p94
      %p97 = scmp.ne.s32.totalorder %s82, %s96
      %p98 = scmp.eq.s32.totalorder %s30, 0
      %p99 = por %p97, %p98
      %s101 = sadd.s32 %s100, 1
      %p104 = scmp.eq.s32.totalorder %s24, 1
      %p105 = scmp.ne.s32.totalorder %s100, %s102
      %p106 = scmp.eq.s32.totalorder %s24, 0
      %p107 = por %p105, %p106
      %p108 = scmp.ne.s32.totalorder %s100, %s102
      %p109 = scmp.eq.s32.totalorder %s29, 1
      %p110 = por %p108, %p109
      %p111 = scmp.ne.s32.totalorder %s102, %s103
      %p112 = scmp.eq.s32.totalorder %s29, 0
      %p113 = por %p111, %p112
      %p114 = scmp.ne.s32.totalorder %s102, %s103
      %p115 = scmp.eq.s32.totalorder %s30, 1
      %p116 = por %p114, %p115
      %p118 = scmp.ne.s32.totalorder %s103, %s117
      %p119 = scmp.eq.s32.totalorder %s30, 0
      %p120 = por %p118, %p119
      %s122 = sadd.s32 %s121, 1
      %p125 = scmp.eq.s32.totalorder %s24, 1
      %p126 = scmp.ne.s32.totalorder %s121, %s123
      %p127 = scmp.eq.s32.totalorder %s24, 0
      %p128 = por %p126, %p127
      %p129 = scmp.ne.s32.totalorder %s121, %s123
      %p130 = scmp.eq.s32.totalorder %s29, 1
      %p131 = por %p129, %p130
      %p132 = scmp.ne.s32.totalorder %s123, %s124
      %p133 = scmp.eq.s32.totalorder %s29, 0
      %p134 = por %p132, %p133
      %p135 = scmp.ne.s32.totalorder %s123, %s124
      %p136 = scmp.eq.s32.totalorder %s30, 1
      %p137 = por %p135, %p136
      %p139 = scmp.ne.s32.totalorder %s124, %s138
      %p140 = scmp.eq.s32.totalorder %s30, 0
      %p141 = por %p139, %p140
      %s143 = sadd.s32 %s142, 1
      %p146 = scmp.eq.s32.totalorder %s24, 1
      %p147 = scmp.ne.s32.totalorder %s142, %s144
      %p148 = scmp.eq.s32.totalorder %s24, 0
      %p149 = por %p147, %p148
      %p150 = scmp.ne.s32.totalorder %s142, %s144
      %p151 = scmp.eq.s32.totalorder %s29, 1
      %p152 = por %p150, %p151
      %p153 = scmp.ne.s32.totalorder %s144, %s145
      %p154 = scmp.eq.s32.totalorder %s29, 0
      %p155 = por %p153, %p154
      %p156 = scmp.ne.s32.totalorder %s144, %s145
      %p157 = scmp.eq.s32.totalorder %s30, 1
      %p158 = por %p156, %p157
      %p160 = scmp.ne.s32.totalorder %s145, %s159
      %p161 = scmp.eq.s32.totalorder %s30, 0
      %p162 = por %p160, %p161
      %s164 = sadd.s32 %s163, 1
      %p167 = scmp.eq.s32.totalorder %s24, 1
      %p168 = scmp.ne.s32.totalorder %s163, %s165
      %p169 = scmp.eq.s32.totalorder %s24, 0
      %p170 = por %p168, %p169
      %p171 = scmp.ne.s32.totalorder %s163, %s165
      %p172 = scmp.eq.s32.totalorder %s29, 1
      %p173 = por %p171, %p172
      %p174 = scmp.ne.s32.totalorder %s165, %s166
      %p175 = scmp.eq.s32.totalorder %s29, 0
      %p176 = por %p174, %p175
      %p177 = scmp.ne.s32.totalorder %s165, %s166
      %p178 = scmp.eq.s32.totalorder %s30, 1
      %p179 = por %p177, %p178
      %p181 = scmp.ne.s32.totalorder %s166, %s180
      %p182 = scmp.eq.s32.totalorder %s30, 0
      %p183 = por %p181, %p182
      %s185 = sadd.s32 %s184, 1
      %p188 = scmp.eq.s32.totalorder %s24, 1
      %p189 = scmp.ne.s32.totalorder %s184, %s186
      %p190 = scmp.eq.s32.totalorder %s24, 0
      %p191 = por %p189, %p190
      %p192 = scmp.ne.s32.totalorder %s184, %s186
      %p193 = scmp.eq.s32.totalorder %s29, 1
      %p194 = por %p192, %p193
      %p195 = scmp.ne.s32.totalorder %s186, %s187
      %p196 = scmp.eq.s32.totalorder %s29, 0
      %p197 = por %p195, %p196
      %p198 = scmp.ne.s32.totalorder %s186, %s187
      %p199 = scmp.eq.s32.totalorder %s30, 1
      %p200 = por %p198, %p199
      %p202 = scmp.ne.s32.totalorder %s187, %s201
      %p203 = scmp.eq.s32.totalorder %s30, 0
      %p204 = por %p202, %p203
      %s206 = sadd.s32 %s205, 1
      %p209 = scmp.eq.s32.totalorder %s24, 1
      %p210 = scmp.ne.s32.totalorder %s205, %s207
      %p211 = scmp.eq.s32.totalorder %s24, 0
      %p212 = por %p210, %p211
      %p213 = scmp.ne.s32.totalorder %s205, %s207
      %p214 = scmp.eq.s32.totalorder %s29, 1
      %p215 = por %p213, %p214
      %p216 = scmp.ne.s32.totalorder %s207, %s208
      %p217 = scmp.eq.s32.totalorder %s29, 0
      %p218 = por %p216, %p217
      %p219 = scmp.ne.s32.totalorder %s207, %s208
      %p220 = scmp.eq.s32.totalorder %s30, 1
      %p221 = por %p219, %p220
      %p223 = scmp.ne.s32.totalorder %s208, %s222
      %p224 = scmp.eq.s32.totalorder %s30, 0
      %p225 = por %p223, %p224
      %s226 = ssub.s32 %s24, %s31
      %p227 = scmp.eq.s32.totalorder %s226, 0
      %s229 = sadd.s32 %s228, 1
      %s230 = scalar_select %p227, %s228, %s229
      %p233 = pneg %p227
      %p234 = scmp.eq.s32.totalorder %s24, 1
      %p235 = por %p233, %p234
      %p236 = scmp.ne.s32.totalorder %s228, %s231
      %p237 = scmp.eq.s32.totalorder %s24, 0
      %p238 = por %p236, %p237
      %p239 = scmp.ne.s32.totalorder %s228, %s231
      %p240 = scmp.eq.s32.totalorder %s29, 1
      %p241 = por %p239, %p240
      %p242 = scmp.ne.s32.totalorder %s231, %s232
      %p243 = scmp.eq.s32.totalorder %s29, 0
      %p244 = por %p242, %p243
      %p245 = scmp.ne.s32.totalorder %s231, %s232
      %p246 = scmp.eq.s32.totalorder %s30, 1
      %p247 = por %p245, %p246
      %p249 = scmp.ne.s32.totalorder %s232, %s248
      %p250 = scmp.eq.s32.totalorder %s30, 0
      %p251 = por %p249, %p250
      %p252 = scmp.le.s32.totalorder 1, %s24
      %p253 = scmp.lt.s32.totalorder %s24, 3
      %p254 = pnand %p252, %p253
      %p255 = pneg %p254
      // Predicated region
      $region9: #{tpu_custom_call.1} parent=5 // pred_check
        _
      $region10: #{tpu_custom_call.1} parent=5 // pred_check_branch
        %257 = sbr.rel (%p254) target = $region12
      $region11: #{tpu_custom_call.1} parent=5 // pred_region
        %s258 = ssub.s32 %s24, 1
        // Predicated region
        $region13: #{tpu_custom_call.1} parent=11 // pred_check
          %p259 = pneg %p71
        $region14: #{tpu_custom_call.1} parent=11 // pred_check_branch
          %261 = sbr.rel (%p259) target = $region16
        $region15: #{tpu_custom_call.1} parent=11 // pred_region
          %s263 = ssub.s32 512, 512
          %264 = vsyncadd [#allocation6], %s263
          %s265 = sshll.u32 [#allocation5], 4
          %s266 = int_to_ptr.vmem [resolvable:$true] %s265
          %271 = dma.hbm_to_vmem [thread:$0]  %s1, 512, %s266, [#allocation6], 64, 64, 4
        $region16: #{tpu_custom_call.1} parent=11 // pred_fallthru
          _
        // Predicated region
        $region17: #{tpu_custom_call.1} parent=11 // pred_check
          %p272 = pneg %p92
        $region18: #{tpu_custom_call.1} parent=11 // pred_check_branch
          %274 = sbr.rel (%p272) target = $region20
        $region19: #{tpu_custom_call.1} parent=11 // pred_region
          %s276 = ssub.s32 1024, 1024
          %277 = vsyncadd [#allocation6], %s276
          %s278 = sshll.u32 [#allocation7], 4
          %s279 = int_to_ptr.vmem [resolvable:$true] %s278
          %284 = dma.hbm_to_vmem [thread:$0]  %s2, 1024, %s279, [#allocation6], 128, 128, 8
        $region20: #{tpu_custom_call.1} parent=11 // pred_fallthru
          _
        // Predicated region
        $region21: #{tpu_custom_call.1} parent=11 // pred_check
          %p285 = pneg %p113
        $region22: #{tpu_custom_call.1} parent=11 // pred_check_branch
          %287 = sbr.rel (%p285) target = $region24
        $region23: #{tpu_custom_call.1} parent=11 // pred_region
          %s289 = ssub.s32 512, 512
          %290 = vsyncadd [#allocation9], %s289
          %s291 = sshll.u32 [#allocation8], 4
          %s292 = int_to_ptr.vmem [resolvable:$true] %s291
          %297 = dma.hbm_to_vmem [thread:$0]  %s3, 512, %s292, [#allocation9], 64, 64, 4
        $region24: #{tpu_custom_call.1} parent=11 // pred_fallthru
          _
        // Predicated region
        $region25: #{tpu_custom_call.1} parent=11 // pred_check
          %p298 = pneg %p134
        $region26: #{tpu_custom_call.1} parent=11 // pred_check_branch
          %300 = sbr.rel (%p298) target = $region28
        $region27: #{tpu_custom_call.1} parent=11 // pred_region
          _
        $region28: #{tpu_custom_call.1} parent=11 // pred_fallthru
          _
        // Predicated region
        $region29: #{tpu_custom_call.1} parent=11 // pred_check
          %p301 = pneg %p155
        $region30: #{tpu_custom_call.1} parent=11 // pred_check_branch
          %303 = sbr.rel (%p301) target = $region32
        $region31: #{tpu_custom_call.1} parent=11 // pred_region
          %s305 = ssub.s32 1024, 1024
          %306 = vsyncadd [#allocation9], %s305
          %s307 = sshll.u32 [#allocation10], 4
          %s308 = int_to_ptr.vmem [resolvable:$true] %s307
          %313 = dma.hbm_to_vmem [thread:$0]  %s5, 1024, %s308, [#allocation9], 64, 64, 4
        $region32: #{tpu_custom_call.1} parent=11 // pred_fallthru
          _
        // Predicated region
        $region33: #{tpu_custom_call.1} parent=11 // pred_check
          %p314 = pneg %p176
        $region34: #{tpu_custom_call.1} parent=11 // pred_check_branch
          %316 = sbr.rel (%p314) target = $region36
        $region35: #{tpu_custom_call.1} parent=11 // pred_region
          %s318 = ssub.s32 1024, 1024
          %319 = vsyncadd [#allocation12], %s318
          %s320 = sshll.u32 [#allocation11], 4
          %s321 = int_to_ptr.vmem [resolvable:$true] %s320
          %326 = dma.hbm_to_vmem [thread:$0]  %s6, 1024, %s321, [#allocation12], 64, 64, 4
        $region36: #{tpu_custom_call.1} parent=11 // pred_fallthru
          _
        // Predicated region
        $region37: #{tpu_custom_call.1} parent=11 // pred_check
          %p327 = pneg %p197
        $region38: #{tpu_custom_call.1} parent=11 // pred_check_branch
          %329 = sbr.rel (%p327) target = $region40
        $region39: #{tpu_custom_call.1} parent=11 // pred_region
          %s331 = ssub.s32 1024, 1024
          %332 = vsyncadd [#allocation12], %s331
          %s333 = sshll.u32 [#allocation13], 4
          %s334 = int_to_ptr.vmem [resolvable:$true] %s333
          %339 = dma.hbm_to_vmem [thread:$0]  %s7, 1024, %s334, [#allocation12], 64, 64, 4
        $region40: #{tpu_custom_call.1} parent=11 // pred_fallthru
          _
        // Predicated region
        $region41: #{tpu_custom_call.1} parent=11 // pred_check
          %p340 = pneg %p218
        $region42: #{tpu_custom_call.1} parent=11 // pred_check_branch
          %342 = sbr.rel (%p340) target = $region44
        $region43: #{tpu_custom_call.1} parent=11 // pred_region
          _
        $region44: #{tpu_custom_call.1} parent=11 // pred_fallthru
          _
      $region12: #{tpu_custom_call.1} parent=5 // pred_fallthru
        _
      %p343 = scmp.lt.s32.totalorder %s24, 2
      // Predicated region
      $region45: #{tpu_custom_call.1} parent=5 // pred_check
        %p344 = pneg %p343
      $region46: #{tpu_custom_call.1} parent=5 // pred_check_branch
        %346 = sbr.rel (%p344) target = $region48
      $region47: #{tpu_custom_call.1} parent=5 // pred_region
        // Predicated region
        $region49: #{tpu_custom_call.1} parent=47 // pred_check
          %p347 = pneg %p44
        $region50: #{tpu_custom_call.1} parent=47 // pred_check_branch
          %349 = sbr.rel (%p347) target = $region52
        $region51: #{tpu_custom_call.1} parent=47 // pred_region
          %s350 = sand.u32 %s34, 1
          %s351 = scalar_lea.sflag [#allocation3], %s350
          %s352 = sand.u32 %s34, 1
          %s353 = smul.addr %s352, 64
          %s354 = scalar_lea.vmem [#allocation2], %s353
          %s355 = smul.u32 4, %s24
          %s357 = ssub.s32 1024, 1024
          %358 = vsyncadd %s351, %s357
          %s359 = smul.addr %s355, 2
          %s360 = smul.addr %s359, 128
          %s361 = scalar_lea.hbm %s0, %s360
          %s362 = sshll.u32 %s354, 4
          %s363 = int_to_ptr.vmem [resolvable:$true] %s362
          %368 = dma.hbm_to_vmem [thread:$0]  %s361, 1024, %s363, %s351, 128, 128, 8
        $region52: #{tpu_custom_call.1} parent=47 // pred_fallthru
          _
      $region48: #{tpu_custom_call.1} parent=5 // pred_fallthru
        _
      %p369 = scmp.le.s32.totalorder 1, %s24
      %p370 = scmp.lt.s32.totalorder %s24, 3
      %p371 = pnand %p369, %p370
      %p372 = pneg %p371
      // Predicated region
      $region53: #{tpu_custom_call.1} parent=5 // pred_check
        _
      $region54: #{tpu_custom_call.1} parent=5 // pred_check_branch
        %374 = sbr.rel (%p371) target = $region56
      $region55: #{tpu_custom_call.1} parent=5 // pred_region
        %s375 = ssub.s32 %s24, 1
        %s376 = sand.u32 %s37, 1
        %s377 = scalar_lea.sflag [#allocation3], %s376
        %s378 = sand.u32 %s37, 1
        %s379 = smul.addr %s378, 64
        %s380 = scalar_lea.vmem [#allocation2], %s379
        // Predicated region
        $region57: #{tpu_custom_call.1} parent=55 // pred_check
          %p381 = pneg %p50
        $region58: #{tpu_custom_call.1} parent=55 // pred_check_branch
          %383 = sbr.rel (%p381) target = $region60
        $region59: #{tpu_custom_call.1} parent=55 // pred_region
          %384 = dma.done %s377, 1024
        $region60: #{tpu_custom_call.1} parent=55 // pred_fallthru
          _
        // Predicated region
        $region61: #{tpu_custom_call.1} parent=55 // pred_check
          %p385 = pneg %p71
        $region62: #{tpu_custom_call.1} parent=55 // pred_check_branch
          %387 = sbr.rel (%p385) target = $region64
        $region63: #{tpu_custom_call.1} parent=55 // pred_region
          %388 = dma.done [#allocation6], 512
        $region64: #{tpu_custom_call.1} parent=55 // pred_fallthru
          _
        // Predicated region
        $region65: #{tpu_custom_call.1} parent=55 // pred_check
          %p389 = pneg %p92
        $region66: #{tpu_custom_call.1} parent=55 // pred_check_branch
          %391 = sbr.rel (%p389) target = $region68
        $region67: #{tpu_custom_call.1} parent=55 // pred_region
          %392 = dma.done [#allocation6], 1024
        $region68: #{tpu_custom_call.1} parent=55 // pred_fallthru
          _
        // Predicated region
        $region69: #{tpu_custom_call.1} parent=55 // pred_check
          %p393 = pneg %p113
        $region70: #{tpu_custom_call.1} parent=55 // pred_check_branch
          %395 = sbr.rel (%p393) target = $region72
        $region71: #{tpu_custom_call.1} parent=55 // pred_region
          %396 = dma.done [#allocation9], 512
        $region72: #{tpu_custom_call.1} parent=55 // pred_fallthru
          _
        // Predicated region
        $region73: #{tpu_custom_call.1} parent=55 // pred_check
          %p397 = pneg %p155
        $region74: #{tpu_custom_call.1} parent=55 // pred_check_branch
          %399 = sbr.rel (%p397) target = $region76
        $region75: #{tpu_custom_call.1} parent=55 // pred_region
          %400 = dma.done [#allocation9], 1024
        $region76: #{tpu_custom_call.1} parent=55 // pred_fallthru
          _
        // Predicated region
        $region77: #{tpu_custom_call.1} parent=55 // pred_check
          %p401 = pneg %p176
        $region78: #{tpu_custom_call.1} parent=55 // pred_check_branch
          %403 = sbr.rel (%p401) target = $region80
        $region79: #{tpu_custom_call.1} parent=55 // pred_region
          %404 = dma.done [#allocation12], 1024
        $region80: #{tpu_custom_call.1} parent=55 // pred_fallthru
          _
        // Predicated region
        $region81: #{tpu_custom_call.1} parent=55 // pred_check
          %p405 = pneg %p197
        $region82: #{tpu_custom_call.1} parent=55 // pred_check_branch
          %407 = sbr.rel (%p405) target = $region84
        $region83: #{tpu_custom_call.1} parent=55 // pred_region
          %408 = dma.done [#allocation12], 1024
        $region84: #{tpu_custom_call.1} parent=55 // pred_fallthru
          _
        %s409 = sand.u32 %s37, 1
        %s410 = scalar_lea.sflag [#allocation3], %s409
        %s411 = sand.u32 %s37, 1
        %s412 = smul.addr %s411, 64
        %s413 = scalar_lea.vmem [#allocation2], %s412
        %p414 = pneg %p50
        %p415 = pneg %p47
        %p416 = pneg %p71
        %p417 = pneg %p68
        %p418 = pneg %p92
        %p419 = pneg %p89
        %p420 = pneg %p113
        %p421 = pneg %p110
        %p422 = pneg %p134
        %p423 = pneg %p131
        %p424 = pneg %p155
        %p425 = pneg %p152
        %p426 = pneg %p176
        %p427 = pneg %p173
        %p428 = pneg %p197
        %p429 = pneg %p194
        %p430 = pneg %p218
        %p431 = pneg %p215
        %p432 = pneg %p244
        %p433 = pneg %p241
        %s434 = sand.u32 %s231, 1
        %s435 = scalar_lea.sflag [#allocation4], %s434
        %s436 = sand.u32 %s231, 1
        %s437 = smul.addr %s436, 64
        %s438 = scalar_lea.vmem [#allocation14], %s437
        %s439 = smul.u32 4, %s29
        %s440 = smul.u32 4, %s29
        %v442 = vld [vmem:[%s380] sm:$0xff]
        %v443 = vld [vmem:[%s380 + $0x8] sm:$0xff]
        %v444 = vld [vmem:[%s380 + $0x10] sm:$0xff]
        %v445 = vld [vmem:[%s380 + $0x18] sm:$0xff]
        %v446 = vld [vmem:[%s380 + $0x20] sm:$0xff]
        %v447 = vld [vmem:[%s380 + $0x28] sm:$0xff]
        %v448 = vld [vmem:[%s380 + $0x30] sm:$0xff]
        %v449 = vld [vmem:[%s380 + $0x38] sm:$0xff]
        %v450 = vpack.c.bf16 %v443, %v442
        %v451 = vpack.c.bf16 %v445, %v444
        %v452 = vpack.c.bf16 %v447, %v446
        %v453 = vpack.c.bf16 %v449, %v448
        %v455 = vshrl.u32 %v450, 16
        %v457 = vrot.slane %v455, 7
        %v458 = vshll.u32 %v450, 16
        %v460 = vor.u32 %v457, %v458
        %v462 = vshrl.u32 %v451, 16
        %v464 = vrot.slane %v462, 7
        %v465 = vshll.u32 %v451, 16
        %v467 = vor.u32 %v464, %v465
        %v469 = vshrl.u32 %v452, 16
        %v471 = vrot.slane %v469, 7
        %v472 = vshll.u32 %v452, 16
        %v474 = vor.u32 %v471, %v472
        %v476 = vshrl.u32 %v453, 16
        %v478 = vrot.slane %v476, 7
        %v479 = vshll.u32 %v453, 16
        %v481 = vor.u32 %v478, %v479
        %vm486 = vcmask 1040384
        %vm487 = vsmask.f32 256
        %vm488 = vmand %vm486, %vm487
        %v489 = vsel %vm488, 0, %v460
        %v490 = vsel %vm488, 0, %v467
        %v491 = vsel %vm488, 0, %v474
        %v492 = vsel %vm488, 0, %v481
        %v493 = vrot.slane %v458, 1
        %v494 = vor.u32 %v455, %v493
        %v495 = vrot.slane %v465, 1
        %v496 = vor.u32 %v462, %v495
        %v497 = vrot.slane %v472, 1
        %v498 = vor.u32 %v469, %v497
        %v499 = vrot.slane %v479, 1
        %v500 = vor.u32 %v476, %v499
        %vm505 = vcmask 1047552
        %vm506 = vsmask.f32 7424
        %vm507 = vmand %vm505, %vm506
        %v508 = vsel %vm507, %v494, 0
        %v509 = vsel %vm507, %v496, 0
        %v510 = vsel %vm507, %v498, 0
        %v511 = vsel %vm507, %v500, 0
        %v512 = vld [vmem:[#allocation5] sm:$0xf]
        %v513 = vld [vmem:[#allocation5 + $0x4] sm:$0xf]
        %v514 = vld [vmem:[#allocation5 + $0x8] sm:$0xf]
        %v515 = vld [vmem:[#allocation5 + $0xc] sm:$0xf]
        %v516 = vld [vmem:[#allocation5 + $0x10] sm:$0xf]
        %v517 = vld [vmem:[#allocation5 + $0x14] sm:$0xf]
        %v518 = vld [vmem:[#allocation5 + $0x18] sm:$0xf]
        %v519 = vld [vmem:[#allocation5 + $0x1c] sm:$0xf]
        %v520 = vld [vmem:[#allocation7] sm:$0xff]
        %v521 = vld [vmem:[#allocation7 + $0x8] sm:$0xff]
        %v522 = vld [vmem:[#allocation7 + $0x10] sm:$0xff]
        %v523 = vld [vmem:[#allocation7 + $0x18] sm:$0xff]
        %v524 = vld [vmem:[#allocation7 + $0x20] sm:$0xff]
        %v525 = vld [vmem:[#allocation7 + $0x28] sm:$0xff]
        %v526 = vld [vmem:[#allocation7 + $0x30] sm:$0xff]
        %v527 = vld [vmem:[#allocation7 + $0x38] sm:$0xff]
        %v536 = vunpack.c.l.b16 %v520
        %v537 = vunpack.c.h.b16 %v520
        %v538 = vunpack.c.l.b16 %v521
        %v539 = vunpack.c.h.b16 %v521
        %v540 = vunpack.c.l.b16 %v522
        %v541 = vunpack.c.h.b16 %v522
        %v542 = vunpack.c.l.b16 %v523
        %v543 = vunpack.c.h.b16 %v523
        %v544 = vunpack.c.l.b16 %v524
        %v545 = vunpack.c.h.b16 %v524
        %v546 = vunpack.c.l.b16 %v525
        %v547 = vunpack.c.h.b16 %v525
        %v548 = vunpack.c.l.b16 %v526
        %v549 = vunpack.c.h.b16 %v526
        %v550 = vunpack.c.l.b16 %v527
        %v551 = vunpack.c.h.b16 %v527
        %v552 = vpack.c.b16 %v538, %v536
        %v553 = vpack.c.b16 %v539, %v537
        %v554 = vpack.c.b16 %v542, %v540
        %v555 = vpack.c.b16 %v543, %v541
        %v556 = vpack.c.b16 %v546, %v544
        %v557 = vpack.c.b16 %v547, %v545
        %v558 = vpack.c.b16 %v550, %v548
        %v559 = vpack.c.b16 %v551, %v549
        %vm568 = vcmask 523264
        %v569 = vsel %vm568, %v450, 0
        %v571 = vsel %vm568, %v451, 0
        %v573 = vsel %vm568, %v452, 0
        %v575 = vsel %vm568, %v453, 0
        %577 = vmatprep.subr.bf16.mxu0 %v553
        %578 = vmatpush1.bf16.msra.mxu0 %v552
        %579 = vmatprep.subr.bf16.mxu0 %v555
        %580 = vmatpush1.bf16.msra.mxu0 %v554
        %581 = vmatprep.subr.bf16.mxu0 %v557
        %582 = vmatpush1.bf16.msra.mxu0 %v556
        %583 = vmatprep.subr.bf16.mxu0 %v559
        %584 = vmatpush1.bf16.msra.mxu0 %v558
        %585 = vmatprep.subr.bf16.mxu0 0
        %586 = vmatpush1.bf16.msra.mxu0 0
        %587 = vmatprep.subr.bf16.mxu0 0
        %588 = vmatpush1.bf16.msra.mxu0 0
        %589 = vmatprep.subr.bf16.mxu0 0
        %590 = vmatpush1.bf16.msra.mxu0 0
        %591 = vmatprep.subr.bf16.mxu0 0
        %592 = vmatpush1.bf16.msra.mxu0 0
        %593 = vmatprep.subr.bf16.mxu0 0
        %594 = vmatpush1.bf16.msra.mxu0 0
        %595 = vmatprep.subr.bf16.mxu0 0
        %596 = vmatpush1.bf16.msra.mxu0 0
        %597 = vmatprep.subr.bf16.mxu0 0
        %598 = vmatpush1.bf16.msra.mxu0 0
        %599 = vmatprep.subr.bf16.mxu0 0
        %600 = vmatpush1.bf16.msra.mxu0 0
        %601 = vmatprep.subr.bf16.mxu0 0
        %602 = vmatpush1.bf16.msra.mxu0 0
        %603 = vmatprep.subr.bf16.mxu0 0
        %604 = vmatpush1.bf16.msra.mxu0 0
        %605 = vmatprep.subr.bf16.mxu0 0
        %606 = vmatpush1.bf16.msra.mxu0 0
        %607 = vmatprep.subr.bf16.mxu0 0
        %608 = vmatpush1.bf16.msra.mxu0 0
        %609 = vmatprep.mubr.bf16.mxu0 0
        %610 = vmatmul.mubr.bf16.gmra.mrb[0].mxu0 %v569
        %v611 = vpop.f32.mrb[0].mxu0
        %v612 = vadd.f32 0.0, %v611
        %v613 = vpop.f32.mrb[0].mxu0
        %v614 = vadd.f32 0.0, %v613
        %v615 = vpop.f32.mrb[0].mxu0
        %v616 = vadd.f32 0.0, %v615
        %v617 = vpop.f32.mrb[0].mxu0
        %v618 = vadd.f32 0.0, %v617
        %619 = vmatprep.mubr.bf16.mxu0 0
        %620 = vmatmul.mubr.bf16.gmra.mrb[0].mxu0 %v571
        %v621 = vpop.f32.mrb[0].mxu0
        %v622 = vadd.f32 0.0, %v621
        %v623 = vpop.f32.mrb[0].mxu0
        %v624 = vadd.f32 0.0, %v623
        %v625 = vpop.f32.mrb[0].mxu0
        %v626 = vadd.f32 0.0, %v625
        %v627 = vpop.f32.mrb[0].mxu0
        %v628 = vadd.f32 0.0, %v627
        %629 = vmatprep.mubr.bf16.mxu0 0
        %630 = vmatmul.mubr.bf16.gmra.mrb[0].mxu0 %v573
        %v631 = vpop.f32.mrb[0].mxu0
        %v632 = vadd.f32 0.0, %v631
        %v633 = vpop.f32.mrb[0].mxu0
        %v634 = vadd.f32 0.0, %v633
        %v635 = vpop.f32.mrb[0].mxu0
        %v636 = vadd.f32 0.0, %v635
        %v637 = vpop.f32.mrb[0].mxu0
        %v638 = vadd.f32 0.0, %v637
        %639 = vmatprep.mubr.bf16.mxu0 0
        %640 = vmatmul.mubr.bf16.gmra.mrb[0].mxu0 %v575
        %v641 = vpop.f32.mrb[0].mxu0
        %v642 = vadd.f32 0.0, %v641
        %v643 = vpop.f32.mrb[0].mxu0
        %v644 = vadd.f32 0.0, %v643
        %v645 = vpop.f32.mrb[0].mxu0
        %v646 = vadd.f32 0.0, %v645
        %v647 = vpop.f32.mrb[0].mxu0
        %v648 = vadd.f32 0.0, %v647
        %649 = vdwg.mxu0
        %v650 = vld [vmem:[#allocation8] sm:$0xf]
        %v651 = vld [vmem:[#allocation8 + $0x4] sm:$0xf]
        %v652 = vld [vmem:[#allocation8 + $0x8] sm:$0xf]
        %v653 = vld [vmem:[#allocation8 + $0xc] sm:$0xf]
        %v654 = vld [vmem:[#allocation8 + $0x10] sm:$0xf]
        %v655 = vld [vmem:[#allocation8 + $0x14] sm:$0xf]
        %v656 = vld [vmem:[#allocation8 + $0x18] sm:$0xf]
        %v657 = vld [vmem:[#allocation8 + $0x1c] sm:$0xf]
        %v666 = vunpack.c.l.b16 %v650
        %v667 = vunpack.c.l.b16 %v651
        %v668 = vunpack.c.l.b16 %v652
        %v669 = vunpack.c.l.b16 %v653
        %v670 = vunpack.c.l.b16 %v654
        %v671 = vunpack.c.l.b16 %v655
        %v672 = vunpack.c.l.b16 %v656
        %v673 = vunpack.c.l.b16 %v657
        %v674 = vpack.c.b16 %v667, %v666
        %v675 = vpack.c.b16 %v669, %v668
        %v676 = vpack.c.b16 %v671, %v670
        %v677 = vpack.c.b16 %v673, %v672
        %v683 = vsel %vm568, %v508, 0
        %v686 = vsel %vm568, %v509, 0
        %v689 = vsel %vm568, %v510, 0
        %v692 = vsel %vm568, %v511, 0
        %694 = vmatprep.subr.bf16.mxu0 0
        %695 = vmatpush1.bf16.msra.mxu0 %v674
        %696 = vmatprep.subr.bf16.mxu0 0
        %697 = vmatpush1.bf16.msra.mxu0 %v675
        %698 = vmatprep.subr.bf16.mxu0 0
        %699 = vmatpush1.bf16.msra.mxu0 %v676
        %700 = vmatprep.subr.bf16.mxu0 0
        %701 = vmatpush1.bf16.msra.mxu0 %v677
        %702 = vmatprep.subr.bf16.mxu0 0
        %703 = vmatpush1.bf16.msra.mxu0 0
        %704 = vmatprep.subr.bf16.mxu0 0
        %705 = vmatpush1.bf16.msra.mxu0 0
        %706 = vmatprep.subr.bf16.mxu0 0
        %707 = vmatpush1.bf16.msra.mxu0 0
        %708 = vmatprep.subr.bf16.mxu0 0
        %709 = vmatpush1.bf16.msra.mxu0 0
        %710 = vmatprep.subr.bf16.mxu0 0
        %711 = vmatpush1.bf16.msra.mxu0 0
        %712 = vmatprep.subr.bf16.mxu0 0
        %713 = vmatpush1.bf16.msra.mxu0 0
        %714 = vmatprep.subr.bf16.mxu0 0
        %715 = vmatpush1.bf16.msra.mxu0 0
        %716 = vmatprep.subr.bf16.mxu0 0
        %717 = vmatpush1.bf16.msra.mxu0 0
        %718 = vmatprep.subr.bf16.mxu0 0
        %719 = vmatpush1.bf16.msra.mxu0 0
        %720 = vmatprep.subr.bf16.mxu0 0
        %721 = vmatpush1.bf16.msra.mxu0 0
        %722 = vmatprep.subr.bf16.mxu0 0
        %723 = vmatpush1.bf16.msra.mxu0 0
        %724 = vmatprep.subr.bf16.mxu0 0
        %725 = vmatpush1.bf16.msra.mxu0 0
        %726 = vmatprep.mubr.bf16.mxu0 0
        %727 = vmatmul.mubr.bf16.gmra.mrb[0].mxu0 %v683
        %v728 = vpop.f32.mrb[0].mxu0
        %v729 = vadd.f32 0.0, %v728
        %v730 = vpop.f32.mrb[0].mxu0
        %v731 = vpop.f32.mrb[0].mxu0
        %v732 = vadd.f32 0.0, %v731
        %v733 = vpop.f32.mrb[0].mxu0
        %734 = vmatprep.mubr.bf16.mxu0 0
        %735 = vmatmul.mubr.bf16.gmra.mrb[0].mxu0 %v686
        %v736 = vpop.f32.mrb[0].mxu0
        %v737 = vadd.f32 0.0, %v736
        %v738 = vpop.f32.mrb[0].mxu0
        %v739 = vpop.f32.mrb[0].mxu0
        %v740 = vadd.f32 0.0, %v739
        %v741 = vpop.f32.mrb[0].mxu0
        %742 = vmatprep.mubr.bf16.mxu0 0
        %743 = vmatmul.mubr.bf16.gmra.mrb[0].mxu0 %v689
        %v744 = vpop.f32.mrb[0].mxu0
        %v745 = vadd.f32 0.0, %v744
        %v746 = vpop.f32.mrb[0].mxu0
        %v747 = vpop.f32.mrb[0].mxu0
        %v748 = vadd.f32 0.0, %v747
        %v749 = vpop.f32.mrb[0].mxu0
        %750 = vmatprep.mubr.bf16.mxu0 0
        %751 = vmatmul.mubr.bf16.gmra.mrb[0].mxu0 %v692
        %v752 = vpop.f32.mrb[0].mxu0
        %v753 = vadd.f32 0.0, %v752
        %v754 = vpop.f32.mrb[0].mxu0
        %v755 = vpop.f32.mrb[0].mxu0
        %v756 = vadd.f32 0.0, %v755
        %v757 = vpop.f32.mrb[0].mxu0
        %758 = vdwg.mxu0
        %v767 = vunpack.c.l.b16 %v512
        %v768 = vunpack.c.l.b16 %v513
        %v769 = vunpack.c.l.b16 %v514
        %v770 = vunpack.c.l.b16 %v515
        %v771 = vunpack.c.l.b16 %v516
        %v772 = vunpack.c.l.b16 %v517
        %v773 = vunpack.c.l.b16 %v518
        %v774 = vunpack.c.l.b16 %v519
        %v775 = vpack.c.b16 %v768, %v767
        %v776 = vpack.c.b16 %v770, %v769
        %v777 = vpack.c.b16 %v772, %v771
        %v778 = vpack.c.b16 %v774, %v773
        %v784 = vsel %vm568, %v489, 0
        %v787 = vsel %vm568, %v490, 0
        %v790 = vsel %vm568, %v491, 0
        %v793 = vsel %vm568, %v492, 0
        %795 = vmatprep.subr.bf16.mxu0 0
        %796 = vmatpush1.bf16.msra.mxu0 %v775
        %797 = vmatprep.subr.bf16.mxu0 0
        %798 = vmatpush1.bf16.msra.mxu0 %v776
        %799 = vmatprep.subr.bf16.mxu0 0
        %800 = vmatpush1.bf16.msra.mxu0 %v777
        %801 = vmatprep.subr.bf16.mxu0 0
        %802 = vmatpush1.bf16.msra.mxu0 %v778
        %803 = vmatprep.subr.bf16.mxu0 0
        %804 = vmatpush1.bf16.msra.mxu0 0
        %805 = vmatprep.subr.bf16.mxu0 0
        %806 = vmatpush1.bf16.msra.mxu0 0
        %807 = vmatprep.subr.bf16.mxu0 0
        %808 = vmatpush1.bf16.msra.mxu0 0
        %809 = vmatprep.subr.bf16.mxu0 0
        %810 = vmatpush1.bf16.msra.mxu0 0
        %811 = vmatprep.subr.bf16.mxu0 0
        %812 = vmatpush1.bf16.msra.mxu0 0
        %813 = vmatprep.subr.bf16.mxu0 0
        %814 = vmatpush1.bf16.msra.mxu0 0
        %815 = vmatprep.subr.bf16.mxu0 0
        %816 = vmatpush1.bf16.msra.mxu0 0
        %817 = vmatprep.subr.bf16.mxu0 0
        %818 = vmatpush1.bf16.msra.mxu0 0
        %819 = vmatprep.subr.bf16.mxu0 0
        %820 = vmatpush1.bf16.msra.mxu0 0
        %821 = vmatprep.subr.bf16.mxu0 0
        %822 = vmatpush1.bf16.msra.mxu0 0
        %823 = vmatprep.subr.bf16.mxu0 0
        %824 = vmatpush1.bf16.msra.mxu0 0
        %825 = vmatprep.subr.bf16.mxu0 0
        %826 = vmatpush1.bf16.msra.mxu0 0
        %827 = vmatprep.mubr.bf16.mxu0 0
        %828 = vmatmul.mubr.bf16.gmra.mrb[0].mxu0 %v784
        %v829 = vpop.f32.mrb[0].mxu0
        %v830 = vadd.f32 %v612, %v829
        %v831 = vpop.f32.mrb[0].mxu0
        %v832 = vpop.f32.mrb[0].mxu0
        %v833 = vadd.f32 %v616, %v832
        %v834 = vpop.f32.mrb[0].mxu0
        %835 = vmatprep.mubr.bf16.mxu0 0
        %836 = vmatmul.mubr.bf16.gmra.mrb[0].mxu0 %v787
        %v837 = vpop.f32.mrb[0].mxu0
        %v838 = vadd.f32 %v622, %v837
        %v839 = vpop.f32.mrb[0].mxu0
        %v840 = vpop.f32.mrb[0].mxu0
        %v841 = vadd.f32 %v626, %v840
        %v842 = vpop.f32.mrb[0].mxu0
        %843 = vmatprep.mubr.bf16.mxu0 0
        %844 = vmatmul.mubr.bf16.gmra.mrb[0].mxu0 %v790
        %v845 = vpop.f32.mrb[0].mxu0
        %v846 = vadd.f32 %v632, %v845
        %v847 = vpop.f32.mrb[0].mxu0
        %v848 = vpop.f32.mrb[0].mxu0
        %v849 = vadd.f32 %v636, %v848
        %v850 = vpop.f32.mrb[0].mxu0
        %851 = vmatprep.mubr.bf16.mxu0 0
        %852 = vmatmul.mubr.bf16.gmra.mrb[0].mxu0 %v793
        %v853 = vpop.f32.mrb[0].mxu0
        %v854 = vadd.f32 %v642, %v853
        %v855 = vpop.f32.mrb[0].mxu0
        %v856 = vpop.f32.mrb[0].mxu0
        %v857 = vadd.f32 %v646, %v856
        %v858 = vpop.f32.mrb[0].mxu0
        %859 = vdwg.mxu0
        %v860 = vadd.f32 %v830, %v729
        %v861 = vadd.f32 %v833, %v732
        %v862 = vadd.f32 %v838, %v737
        %v863 = vadd.f32 %v841, %v740
        %v864 = vadd.f32 %v846, %v745
        %v865 = vadd.f32 %v849, %v748
        %v866 = vadd.f32 %v854, %v753
        %v867 = vadd.f32 %v857, %v756
        %v868 = vld [vmem:[%s4] sm:$0x1]
        %v870 = vlaneseq
        %v871 = vshrl.u32 %v870, 7
        %v872 = vsub.s32 0, %v871
        %v873 = vrot.slane %v868, %v872
        %v875 = vadd.f32 %v860, %v873
        %v876 = vadd.f32 %v861, %v873
        %v877 = vadd.f32 %v862, %v873
        %v878 = vadd.f32 %v863, %v873
        %v879 = vadd.f32 %v864, %v873
        %v880 = vadd.f32 %v865, %v873
        %v881 = vadd.f32 %v866, %v873
        %v882 = vadd.f32 %v867, %v873
        %v883 = vmax.f32 %v875, 0.0
        %v884 = vmax.f32 %v876, 0.0
        %v885 = vmax.f32 %v877, 0.0
        %v886 = vmax.f32 %v878, 0.0
        %v887 = vmax.f32 %v879, 0.0
        %v888 = vmax.f32 %v880, 0.0
        %v889 = vmax.f32 %v881, 0.0
        %v890 = vmax.f32 %v882, 0.0
        %v891 = vpack.c.bf16 %v884, %v883
        %v892 = vpack.c.bf16 %v886, %v885
        %v893 = vpack.c.bf16 %v888, %v887
        %v894 = vpack.c.bf16 %v890, %v889
        %v896 = vshrl.u32 %v891, 16
        %v898 = vrot.slane %v896, 7
        %v899 = vshll.u32 %v891, 16
        %v901 = vor.u32 %v898, %v899
        %v903 = vshrl.u32 %v892, 16
        %v905 = vrot.slane %v903, 7
        %v906 = vshll.u32 %v892, 16
        %v908 = vor.u32 %v905, %v906
        %v910 = vshrl.u32 %v893, 16
        %v912 = vrot.slane %v910, 7
        %v913 = vshll.u32 %v893, 16
        %v915 = vor.u32 %v912, %v913
        %v917 = vshrl.u32 %v894, 16
        %v919 = vrot.slane %v917, 7
        %v920 = vshll.u32 %v894, 16
        %v922 = vor.u32 %v919, %v920
        %v927 = vsel %vm488, 0, %v901
        %v928 = vsel %vm488, 0, %v908
        %v929 = vsel %vm488, 0, %v915
        %v930 = vsel %vm488, 0, %v922
        %v931 = vrot.slane %v899, 1
        %v932 = vor.u32 %v896, %v931
        %v933 = vrot.slane %v906, 1
        %v934 = vor.u32 %v903, %v933
        %v935 = vrot.slane %v913, 1
        %v936 = vor.u32 %v910, %v935
        %v937 = vrot.slane %v920, 1
        %v938 = vor.u32 %v917, %v937
        %v943 = vsel %vm507, %v932, 0
        %v944 = vsel %vm507, %v934, 0
        %v945 = vsel %vm507, %v936, 0
        %v946 = vsel %vm507, %v938, 0
        %v947 = vld [vmem:[#allocation10] sm:$0xf]
        %v948 = vld [vmem:[#allocation10 + $0x4] sm:$0xf]
        %v949 = vld [vmem:[#allocation10 + $0x8] sm:$0xf]
        %v950 = vld [vmem:[#allocation10 + $0xc] sm:$0xf]
        %v951 = vld [vmem:[#allocation10 + $0x10] sm:$0xf]
        %v952 = vld [vmem:[#allocation10 + $0x14] sm:$0xf]
        %v953 = vld [vmem:[#allocation10 + $0x18] sm:$0xf]
        %v954 = vld [vmem:[#allocation10 + $0x1c] sm:$0xf]
        %v955 = vld [vmem:[#allocation10 + $0x20] sm:$0xf]
        %v956 = vld [vmem:[#allocation10 + $0x24] sm:$0xf]
        %v957 = vld [vmem:[#allocation10 + $0x28] sm:$0xf]
        %v958 = vld [vmem:[#allocation10 + $0x2c] sm:$0xf]
        %v959 = vld [vmem:[#allocation10 + $0x30] sm:$0xf]
        %v960 = vld [vmem:[#allocation10 + $0x34] sm:$0xf]
        %v961 = vld [vmem:[#allocation10 + $0x38] sm:$0xf]
        %v962 = vld [vmem:[#allocation10 + $0x3c] sm:$0xf]
        %v963 = vld [vmem:[#allocation11] sm:$0xf]
        %v964 = vld [vmem:[#allocation11 + $0x4] sm:$0xf]
        %v965 = vld [vmem:[#allocation11 + $0x8] sm:$0xf]
        %v966 = vld [vmem:[#allocation11 + $0xc] sm:$0xf]
        %v967 = vld [vmem:[#allocation11 + $0x10] sm:$0xf]
        %v968 = vld [vmem:[#allocation11 + $0x14] sm:$0xf]
        %v969 = vld [vmem:[#allocation11 + $0x18] sm:$0xf]
        %v970 = vld [vmem:[#allocation11 + $0x1c] sm:$0xf]
        %v971 = vld [vmem:[#allocation11 + $0x20] sm:$0xf]
        %v972 = vld [vmem:[#allocation11 + $0x24] sm:$0xf]
        %v973 = vld [vmem:[#allocation11 + $0x28] sm:$0xf]
        %v974 = vld [vmem:[#allocation11 + $0x2c] sm:$0xf]
        %v975 = vld [vmem:[#allocation11 + $0x30] sm:$0xf]
        %v976 = vld [vmem:[#allocation11 + $0x34] sm:$0xf]
        %v977 = vld [vmem:[#allocation11 + $0x38] sm:$0xf]
        %v978 = vld [vmem:[#allocation11 + $0x3c] sm:$0xf]
        %v995 = vunpack.c.l.b16 %v963
        %v996 = vunpack.c.l.b16 %v964
        %v997 = vunpack.c.l.b16 %v965
        %v998 = vunpack.c.l.b16 %v966
        %v999 = vunpack.c.l.b16 %v967
        %v1000 = vunpack.c.l.b16 %v968
        %v1001 = vunpack.c.l.b16 %v969
        %v1002 = vunpack.c.l.b16 %v970
        %v1003 = vunpack.c.l.b16 %v971
        %v1004 = vunpack.c.l.b16 %v972
        %v1005 = vunpack.c.l.b16 %v973
        %v1006 = vunpack.c.l.b16 %v974
        %v1007 = vunpack.c.l.b16 %v975
        %v1008 = vunpack.c.l.b16 %v976
        %v1009 = vunpack.c.l.b16 %v977
        %v1010 = vunpack.c.l.b16 %v978
        %v1011 = vpack.c.b16 %v996, %v995
        %v1012 = vpack.c.b16 %v998, %v997
        %v1013 = vpack.c.b16 %v1000, %v999
        %v1014 = vpack.c.b16 %v1002, %v1001
        %v1015 = vpack.c.b16 %v1004, %v1003
        %v1016 = vpack.c.b16 %v1006, %v1005
        %v1017 = vpack.c.b16 %v1008, %v1007
        %v1018 = vpack.c.b16 %v1010, %v1009
        %1027 = vmatprep.subr.bf16.mxu0 0
        %1028 = vmatpush1.bf16.msra.mxu0 %v1011
        %1029 = vmatprep.subr.bf16.mxu0 0
        %1030 = vmatpush1.bf16.msra.mxu0 %v1012
        %1031 = vmatprep.subr.bf16.mxu0 0
        %1032 = vmatpush1.bf16.msra.mxu0 %v1013
        %1033 = vmatprep.subr.bf16.mxu0 0
        %1034 = vmatpush1.bf16.msra.mxu0 %v1014
        %1035 = vmatprep.subr.bf16.mxu0 0
        %1036 = vmatpush1.bf16.msra.mxu0 %v1015
        %1037 = vmatprep.subr.bf16.mxu0 0
        %1038 = vmatpush1.bf16.msra.mxu0 %v1016
        %1039 = vmatprep.subr.bf16.mxu0 0
        %1040 = vmatpush1.bf16.msra.mxu0 %v1017
        %1041 = vmatprep.subr.bf16.mxu0 0
        %1042 = vmatpush1.bf16.msra.mxu0 %v1018
        %1043 = vmatprep.subr.bf16.mxu0 0
        %1044 = vmatpush1.bf16.msra.mxu0 0
        %1045 = vmatprep.subr.bf16.mxu0 0
        %1046 = vmatpush1.bf16.msra.mxu0 0
        %1047 = vmatprep.subr.bf16.mxu0 0
        %1048 = vmatpush1.bf16.msra.mxu0 0
        %1049 = vmatprep.subr.bf16.mxu0 0
        %1050 = vmatpush1.bf16.msra.mxu0 0
        %1051 = vmatprep.subr.bf16.mxu0 0
        %1052 = vmatpush1.bf16.msra.mxu0 0
        %1053 = vmatprep.subr.bf16.mxu0 0
        %1054 = vmatpush1.bf16.msra.mxu0 0
        %1055 = vmatprep.subr.bf16.mxu0 0
        %1056 = vmatpush1.bf16.msra.mxu0 0
        %1057 = vmatprep.subr.bf16.mxu0 0
        %1058 = vmatpush1.bf16.msra.mxu0 0
        %1059 = vmatprep.mubr.bf16.mxu0 0
        %1060 = vmatmul.mubr.bf16.gmra.mrb[0].mxu0 %v891
        %v1061 = vpop.f32.mrb[0].mxu0
        %v1062 = vadd.f32 0.0, %v1061
        %v1063 = vpop.f32.mrb[0].mxu0
        %v1064 = vpop.f32.mrb[0].mxu0
        %v1065 = vadd.f32 0.0, %v1064
        %v1066 = vpop.f32.mrb[0].mxu0
        %1067 = vmatprep.mubr.bf16.mxu0 0
        %1068 = vmatmul.mubr.bf16.gmra.mrb[0].mxu0 %v892
        %v1069 = vpop.f32.mrb[0].mxu0
        %v1070 = vadd.f32 0.0, %v1069
        %v1071 = vpop.f32.mrb[0].mxu0
        %v1072 = vpop.f32.mrb[0].mxu0
        %v1073 = vadd.f32 0.0, %v1072
        %v1074 = vpop.f32.mrb[0].mxu0
        %1075 = vmatprep.mubr.bf16.mxu0 0
        %1076 = vmatmul.mubr.bf16.gmra.mrb[0].mxu0 %v893
        %v1077 = vpop.f32.mrb[0].mxu0
        %v1078 = vadd.f32 0.0, %v1077
        %v1079 = vpop.f32.mrb[0].mxu0
        %v1080 = vpop.f32.mrb[0].mxu0
        %v1081 = vadd.f32 0.0, %v1080
        %v1082 = vpop.f32.mrb[0].mxu0
        %1083 = vmatprep.mubr.bf16.mxu0 0
        %1084 = vmatmul.mubr.bf16.gmra.mrb[0].mxu0 %v894
        %v1085 = vpop.f32.mrb[0].mxu0
        %v1086 = vadd.f32 0.0, %v1085
        %v1087 = vpop.f32.mrb[0].mxu0
        %v1088 = vpop.f32.mrb[0].mxu0
        %v1089 = vadd.f32 0.0, %v1088
        %v1090 = vpop.f32.mrb[0].mxu0
        %1091 = vdwg.mxu0
        %v1092 = vld [vmem:[#allocation13] sm:$0xf]
        %v1093 = vld [vmem:[#allocation13 + $0x4] sm:$0xf]
        %v1094 = vld [vmem:[#allocation13 + $0x8] sm:$0xf]
        %v1095 = vld [vmem:[#allocation13 + $0xc] sm:$0xf]
        %v1096 = vld [vmem:[#allocation13 + $0x10] sm:$0xf]
        %v1097 = vld [vmem:[#allocation13 + $0x14] sm:$0xf]
        %v1098 = vld [vmem:[#allocation13 + $0x18] sm:$0xf]
        %v1099 = vld [vmem:[#allocation13 + $0x1c] sm:$0xf]
        %v1100 = vld [vmem:[#allocation13 + $0x20] sm:$0xf]
        %v1101 = vld [vmem:[#allocation13 + $0x24] sm:$0xf]
        %v1102 = vld [vmem:[#allocation13 + $0x28] sm:$0xf]
        %v1103 = vld [vmem:[#allocation13 + $0x2c] sm:$0xf]
        %v1104 = vld [vmem:[#allocation13 + $0x30] sm:$0xf]
        %v1105 = vld [vmem:[#allocation13 + $0x34] sm:$0xf]
        %v1106 = vld [vmem:[#allocation13 + $0x38] sm:$0xf]
        %v1107 = vld [vmem:[#allocation13 + $0x3c] sm:$0xf]
        %v1124 = vunpack.c.l.b16 %v1092
        %v1125 = vunpack.c.l.b16 %v1093
        %v1126 = vunpack.c.l.b16 %v1094
        %v1127 = vunpack.c.l.b16 %v1095
        %v1128 = vunpack.c.l.b16 %v1096
        %v1129 = vunpack.c.l.b16 %v1097
        %v1130 = vunpack.c.l.b16 %v1098
        %v1131 = vunpack.c.l.b16 %v1099
        %v1132 = vunpack.c.l.b16 %v1100
        %v1133 = vunpack.c.l.b16 %v1101
        %v1134 = vunpack.c.l.b16 %v1102
        %v1135 = vunpack.c.l.b16 %v1103
        %v1136 = vunpack.c.l.b16 %v1104
        %v1137 = vunpack.c.l.b16 %v1105
        %v1138 = vunpack.c.l.b16 %v1106
        %v1139 = vunpack.c.l.b16 %v1107
        %v1140 = vpack.c.b16 %v1125, %v1124
        %v1141 = vpack.c.b16 %v1127, %v1126
        %v1142 = vpack.c.b16 %v1129, %v1128
        %v1143 = vpack.c.b16 %v1131, %v1130
        %v1144 = vpack.c.b16 %v1133, %v1132
        %v1145 = vpack.c.b16 %v1135, %v1134
        %v1146 = vpack.c.b16 %v1137, %v1136
        %v1147 = vpack.c.b16 %v1139, %v1138
        %1156 = vmatprep.subr.bf16.mxu0 0
        %1157 = vmatpush1.bf16.msra.mxu0 %v1140
        %1158 = vmatprep.subr.bf16.mxu0 0
        %1159 = vmatpush1.bf16.msra.mxu0 %v1141
        %1160 = vmatprep.subr.bf16.mxu0 0
        %1161 = vmatpush1.bf16.msra.mxu0 %v1142
        %1162 = vmatprep.subr.bf16.mxu0 0
        %1163 = vmatpush1.bf16.msra.mxu0 %v1143
        %1164 = vmatprep.subr.bf16.mxu0 0
        %1165 = vmatpush1.bf16.msra.mxu0 %v1144
        %1166 = vmatprep.subr.bf16.mxu0 0
        %1167 = vmatpush1.bf16.msra.mxu0 %v1145
        %1168 = vmatprep.subr.bf16.mxu0 0
        %1169 = vmatpush1.bf16.msra.mxu0 %v1146
        %1170 = vmatprep.subr.bf16.mxu0 0
        %1171 = vmatpush1.bf16.msra.mxu0 %v1147
        %1172 = vmatprep.subr.bf16.mxu0 0
        %1173 = vmatpush1.bf16.msra.mxu0 0
        %1174 = vmatprep.subr.bf16.mxu0 0
        %1175 = vmatpush1.bf16.msra.mxu0 0
        %1176 = vmatprep.subr.bf16.mxu0 0
        %1177 = vmatpush1.bf16.msra.mxu0 0
        %1178 = vmatprep.subr.bf16.mxu0 0
        %1179 = vmatpush1.bf16.msra.mxu0 0
        %1180 = vmatprep.subr.bf16.mxu0 0
        %1181 = vmatpush1.bf16.msra.mxu0 0
        %1182 = vmatprep.subr.bf16.mxu0 0
        %1183 = vmatpush1.bf16.msra.mxu0 0
        %1184 = vmatprep.subr.bf16.mxu0 0
        %1185 = vmatpush1.bf16.msra.mxu0 0
        %1186 = vmatprep.subr.bf16.mxu0 0
        %1187 = vmatpush1.bf16.msra.mxu0 0
        %1188 = vmatprep.mubr.bf16.mxu0 0
        %1189 = vmatmul.mubr.bf16.gmra.mrb[0].mxu0 %v943
        %v1190 = vpop.f32.mrb[0].mxu0
        %v1191 = vadd.f32 0.0, %v1190
        %v1192 = vpop.f32.mrb[0].mxu0
        %v1193 = vpop.f32.mrb[0].mxu0
        %v1194 = vadd.f32 0.0, %v1193
        %v1195 = vpop.f32.mrb[0].mxu0
        %1196 = vmatprep.mubr.bf16.mxu0 0
        %1197 = vmatmul.mubr.bf16.gmra.mrb[0].mxu0 %v944
        %v1198 = vpop.f32.mrb[0].mxu0
        %v1199 = vadd.f32 0.0, %v1198
        %v1200 = vpop.f32.mrb[0].mxu0
        %v1201 = vpop.f32.mrb[0].mxu0
        %v1202 = vadd.f32 0.0, %v1201
        %v1203 = vpop.f32.mrb[0].mxu0
        %1204 = vmatprep.mubr.bf16.mxu0 0
        %1205 = vmatmul.mubr.bf16.gmra.mrb[0].mxu0 %v945
        %v1206 = vpop.f32.mrb[0].mxu0
        %v1207 = vadd.f32 0.0, %v1206
        %v1208 = vpop.f32.mrb[0].mxu0
        %v1209 = vpop.f32.mrb[0].mxu0
        %v1210 = vadd.f32 0.0, %v1209
        %v1211 = vpop.f32.mrb[0].mxu0
        %1212 = vmatprep.mubr.bf16.mxu0 0
        %1213 = vmatmul.mubr.bf16.gmra.mrb[0].mxu0 %v946
        %v1214 = vpop.f32.mrb[0].mxu0
        %v1215 = vadd.f32 0.0, %v1214
        %v1216 = vpop.f32.mrb[0].mxu0
        %v1217 = vpop.f32.mrb[0].mxu0
        %v1218 = vadd.f32 0.0, %v1217
        %v1219 = vpop.f32.mrb[0].mxu0
        %1220 = vdwg.mxu0
        %v1237 = vunpack.c.l.b16 %v947
        %v1238 = vunpack.c.l.b16 %v948
        %v1239 = vunpack.c.l.b16 %v949
        %v1240 = vunpack.c.l.b16 %v950
        %v1241 = vunpack.c.l.b16 %v951
        %v1242 = vunpack.c.l.b16 %v952
        %v1243 = vunpack.c.l.b16 %v953
        %v1244 = vunpack.c.l.b16 %v954
        %v1245 = vunpack.c.l.b16 %v955
        %v1246 = vunpack.c.l.b16 %v956
        %v1247 = vunpack.c.l.b16 %v957
        %v1248 = vunpack.c.l.b16 %v958
        %v1249 = vunpack.c.l.b16 %v959
        %v1250 = vunpack.c.l.b16 %v960
        %v1251 = vunpack.c.l.b16 %v961
        %v1252 = vunpack.c.l.b16 %v962
        %v1253 = vpack.c.b16 %v1238, %v1237
        %v1254 = vpack.c.b16 %v1240, %v1239
        %v1255 = vpack.c.b16 %v1242, %v1241
        %v1256 = vpack.c.b16 %v1244, %v1243
        %v1257 = vpack.c.b16 %v1246, %v1245
        %v1258 = vpack.c.b16 %v1248, %v1247
        %v1259 = vpack.c.b16 %v1250, %v1249
        %v1260 = vpack.c.b16 %v1252, %v1251
        %1269 = vmatprep.subr.bf16.mxu0 0
        %1270 = vmatpush1.bf16.msra.mxu0 %v1253
        %1271 = vmatprep.subr.bf16.mxu0 0
        %1272 = vmatpush1.bf16.msra.mxu0 %v1254
        %1273 = vmatprep.subr.bf16.mxu0 0
        %1274 = vmatpush1.bf16.msra.mxu0 %v1255
        %1275 = vmatprep.subr.bf16.mxu0 0
        %1276 = vmatpush1.bf16.msra.mxu0 %v1256
        %1277 = vmatprep.subr.bf16.mxu0 0
        %1278 = vmatpush1.bf16.msra.mxu0 %v1257
        %1279 = vmatprep.subr.bf16.mxu0 0
        %1280 = vmatpush1.bf16.msra.mxu0 %v1258
        %1281 = vmatprep.subr.bf16.mxu0 0
        %1282 = vmatpush1.bf16.msra.mxu0 %v1259
        %1283 = vmatprep.subr.bf16.mxu0 0
        %1284 = vmatpush1.bf16.msra.mxu0 %v1260
        %1285 = vmatprep.subr.bf16.mxu0 0
        %1286 = vmatpush1.bf16.msra.mxu0 0
        %1287 = vmatprep.subr.bf16.mxu0 0
        %1288 = vmatpush1.bf16.msra.mxu0 0
        %1289 = vmatprep.subr.bf16.mxu0 0
        %1290 = vmatpush1.bf16.msra.mxu0 0
        %1291 = vmatprep.subr.bf16.mxu0 0
        %1292 = vmatpush1.bf16.msra.mxu0 0
        %1293 = vmatprep.subr.bf16.mxu0 0
        %1294 = vmatpush1.bf16.msra.mxu0 0
        %1295 = vmatprep.subr.bf16.mxu0 0
        %1296 = vmatpush1.bf16.msra.mxu0 0
        %1297 = vmatprep.subr.bf16.mxu0 0
        %1298 = vmatpush1.bf16.msra.mxu0 0
        %1299 = vmatprep.subr.bf16.mxu0 0
        %1300 = vmatpush1.bf16.msra.mxu0 0
        %1301 = vmatprep.mubr.bf16.mxu0 0
        %1302 = vmatmul.mubr.bf16.gmra.mrb[0].mxu0 %v927
        %v1303 = vpop.f32.mrb[0].mxu0
        %v1304 = vadd.f32 %v1062, %v1303
        %v1305 = vpop.f32.mrb[0].mxu0
        %v1306 = vpop.f32.mrb[0].mxu0
        %v1307 = vadd.f32 %v1065, %v1306
        %v1308 = vpop.f32.mrb[0].mxu0
        %1309 = vmatprep.mubr.bf16.mxu0 0
        %1310 = vmatmul.mubr.bf16.gmra.mrb[0].mxu0 %v928
        %v1311 = vpop.f32.mrb[0].mxu0
        %v1312 = vadd.f32 %v1070, %v1311
        %v1313 = vpop.f32.mrb[0].mxu0
        %v1314 = vpop.f32.mrb[0].mxu0
        %v1315 = vadd.f32 %v1073, %v1314
        %v1316 = vpop.f32.mrb[0].mxu0
        %1317 = vmatprep.mubr.bf16.mxu0 0
        %1318 = vmatmul.mubr.bf16.gmra.mrb[0].mxu0 %v929
        %v1319 = vpop.f32.mrb[0].mxu0
        %v1320 = vadd.f32 %v1078, %v1319
        %v1321 = vpop.f32.mrb[0].mxu0
        %v1322 = vpop.f32.mrb[0].mxu0
        %v1323 = vadd.f32 %v1081, %v1322
        %v1324 = vpop.f32.mrb[0].mxu0
        %1325 = vmatprep.mubr.bf16.mxu0 0
        %1326 = vmatmul.mubr.bf16.gmra.mrb[0].mxu0 %v930
        %v1327 = vpop.f32.mrb[0].mxu0
        %v1328 = vadd.f32 %v1086, %v1327
        %v1329 = vpop.f32.mrb[0].mxu0
        %v1330 = vpop.f32.mrb[0].mxu0
        %v1331 = vadd.f32 %v1089, %v1330
        %v1332 = vpop.f32.mrb[0].mxu0
        %1333 = vdwg.mxu0
        %v1334 = vadd.f32 %v1304, %v1191
        %v1335 = vadd.f32 %v1307, %v1194
        %v1336 = vadd.f32 %v1312, %v1199
        %v1337 = vadd.f32 %v1315, %v1202
        %v1338 = vadd.f32 %v1320, %v1207
        %v1339 = vadd.f32 %v1323, %v1210
        %v1340 = vadd.f32 %v1328, %v1215
        %v1341 = vadd.f32 %v1331, %v1218
        %v1342 = vadd.f32 %v1334, %v614
        %v1343 = vadd.f32 %v1335, %v618
        %v1344 = vadd.f32 %v1336, %v624
        %v1345 = vadd.f32 %v1337, %v628
        %v1346 = vadd.f32 %v1338, %v634
        %v1347 = vadd.f32 %v1339, %v638
        %v1348 = vadd.f32 %v1340, %v644
        %v1349 = vadd.f32 %v1341, %v648
        %v1350 = vld [vmem:[%s8] sm:$0x1]
        %v1352 = vlaneseq
        %v1353 = vshrl.u32 %v1352, 7
        %v1354 = vsub.s32 0, %v1353
        %v1355 = vrot.slane %v1350, %v1354
        %v1357 = vadd.f32 %v1342, %v1355
        %v1358 = vadd.f32 %v1343, %v1355
        %v1359 = vadd.f32 %v1344, %v1355
        %v1360 = vadd.f32 %v1345, %v1355
        %v1361 = vadd.f32 %v1346, %v1355
        %v1362 = vadd.f32 %v1347, %v1355
        %v1363 = vadd.f32 %v1348, %v1355
        %v1364 = vadd.f32 %v1349, %v1355
        %v1365 = vmax.f32 %v1357, 0.0
        %v1366 = vmax.f32 %v1358, 0.0
        %v1367 = vmax.f32 %v1359, 0.0
        %v1368 = vmax.f32 %v1360, 0.0
        %v1369 = vmax.f32 %v1361, 0.0
        %v1370 = vmax.f32 %v1362, 0.0
        %v1371 = vmax.f32 %v1363, 0.0
        %v1372 = vmax.f32 %v1364, 0.0
        %1373 = vst [vmem:[%s438] sm:$0xff] %v1365
        %1374 = vst [vmem:[%s438 + $0x8] sm:$0xff] %v1366
        %1375 = vst [vmem:[%s438 + $0x10] sm:$0xff] %v1367
        %1376 = vst [vmem:[%s438 + $0x18] sm:$0xff] %v1368
        %1377 = vst [vmem:[%s438 + $0x20] sm:$0xff] %v1369
        %1378 = vst [vmem:[%s438 + $0x28] sm:$0xff] %v1370
        %1379 = vst [vmem:[%s438 + $0x30] sm:$0xff] %v1371
        %1380 = vst [vmem:[%s438 + $0x38] sm:$0xff] %v1372
        %s1381 = sand.u32 %s231, 1
        %s1382 = scalar_lea.sflag [#allocation4], %s1381
        %s1383 = sand.u32 %s231, 1
        %s1384 = smul.addr %s1383, 64
        %s1385 = scalar_lea.vmem [#allocation14], %s1384
        // Predicated region
        $region85: #{tpu_custom_call.1} parent=55 // pred_check
          %p1386 = pneg %p241
        $region86: #{tpu_custom_call.1} parent=55 // pred_check_branch
          %1388 = sbr.rel (%p1386) target = $region88
        $region87: #{tpu_custom_call.1} parent=55 // pred_region
          %s1389 = smul.u32 4, %s29
          %s1391 = ssub.s32 1024, 1024
          %1392 = vsyncadd %s1382, %s1391
          %s1393 = smul.addr %s1389, 2
          %s1394 = smul.addr %s1393, 128
          %s1395 = scalar_lea.hbm %s9, %s1394
          %s1396 = sshll.u32 %s1385, 4
          %s1397 = int_to_ptr.vmem [resolvable:$true] %s1396
          %1402 = dma.vmem_to_hbm [thread:$0]  %s1397, 1024, %s1395, %s1382, 128, 128, 8
        $region88: #{tpu_custom_call.1} parent=55 // pred_fallthru
          _
      $region56: #{tpu_custom_call.1} parent=5 // pred_fallthru
        _
      %p1403 = scmp.le.s32.totalorder 2, %s24
      // Predicated region
      $region89: #{tpu_custom_call.1} parent=5 // pred_check
        %p1404 = pneg %p1403
      $region90: #{tpu_custom_call.1} parent=5 // pred_check_branch
        %1406 = sbr.rel (%p1404) target = $region92
      $region91: #{tpu_custom_call.1} parent=5 // pred_region
        %s1407 = ssub.s32 %s24, 2
        // Predicated region
        $region93: #{tpu_custom_call.1} parent=91 // pred_check
          %p1408 = pneg %p247
        $region94: #{tpu_custom_call.1} parent=91 // pred_check_branch
          %1410 = sbr.rel (%p1408) target = $region96
        $region95: #{tpu_custom_call.1} parent=91 // pred_region
          %s1411 = sand.u32 %s232, 1
          %s1412 = scalar_lea.sflag [#allocation4], %s1411
          %s1413 = sand.u32 %s232, 1
          %s1414 = smul.addr %s1413, 64
          %s1415 = scalar_lea.vmem [#allocation14], %s1414
          %1416 = dma.done %s1412, 1024
        $region96: #{tpu_custom_call.1} parent=91 // pred_fallthru
          _
      $region92: #{tpu_custom_call.1} parent=5 // pred_fallthru
        _
    $region6: #{tpu_custom_call.1} parent=1 // loop_footer
      %s28 = sadd.s32 1, %s24
    $region7: #{tpu_custom_call.1} parent=1 // loop_footer_branch
      %23 = sbr.rel target = $region3
    $region8: #{tpu_custom_call.1} parent=1 // loop_exit
      _
    %1417 = vsyncpa [#allocation3], 1
    %s1418 = scalar_lea.sflag [#allocation3], 1
    %1419 = vsyncpa %s1418, 1
    %1420 = vsyncpa [#allocation6], 1
    %1421 = vsyncpa [#allocation9], 1
    %1422 = vsyncpa [#allocation12], 1
    %1423 = vsyncpa [#allocation4], 1
    %s1424 = scalar_lea.sflag [#allocation4], 1
    %1425 = vsyncpa %s1424, 1

</llo_original>
